<compile_context>
chip_gen: v5e
topology: v5e:2x2
jax: 0.10.0
libtpu: 0.0.40
codegen_flags: <defaults>
</compile_context>

<pallas_src>
import functools

import jax
import jax.numpy as jnp
import numpy as np
from jax.experimental import pallas as pl
from jax.experimental.pallas import tpu as pltpu

EPS = 1e-5  # nn.InstanceNorm2d default eps


# ---------------------------------------------------------------------------
# Fused DenseBlock kernel (per batch element)
# ---------------------------------------------------------------------------
def _dense_block_kernel(alpha_ref, masks_ref, x_ref,
                        w1_ref, w2_ref, w3_ref, b1_ref, b2_ref, b3_ref,
                        out_ref, im_ref, *, H, W, KH, KW, Cp, Fp):
    HW = H * W
    K1 = KH * KW * Cp                 # rows of the x part of the im2col stack
    alpha = alpha_ref[0, 0]           # shared PReLU scalar
    ph, pw = (KH - 1) // 2, (KW - 1) // 2

    def norm_prelu(v):
        # InstanceNorm2d(affine=False, biased variance) + PReLU, per channel row.
        mean = jnp.mean(v, axis=-1, keepdims=True)
        c = v - mean
        var = jnp.mean(c * c, axis=-1, keepdims=True)
        y = c * jax.lax.rsqrt(var + EPS)
        return jnp.where(y >= 0, y, alpha * y)

    def build_stack(act, row0, rows):
        # im2col: write the KH*KW shifted+masked copies of `act` (rows, HW) into
        # im_ref[row0 + k*rows : row0 + (k+1)*rows, :], tap k = ki*KW + kj.
        for ki in range(KH):
            for kj in range(KW):
                k = ki * KW + kj
                s = (ki - ph) * W + (kj - pw)       # want shifted[:, l] = act[:, l+s]
                shifted = act if s == 0 else pltpu.roll(act, (-s) % HW, 1)
                masked = shifted * masks_ref[k]     # zero padding; also kills roll wrap
                r = row0 + k * rows
                im_ref[r:r + rows, :] = masked.astype(im_ref.dtype)

    # norm_k(affine=False) + the shared PReLU act per channel, so the cat() inputs of
    # norm2/norm3 reduce to reusing these per-tensor normalized activations.
    a_x = norm_prelu(x_ref[0])                                   # (Cp, HW) f32
    build_stack(a_x, 0, Cp)                                      # shared: conv1 & conv2
    o3 = jnp.dot(w1_ref[...], im_ref[0:K1, :],                   # conv1: one K=25*Cp dot
                 preferred_element_type=jnp.float32) + b1_ref[...]
    a_o3 = norm_prelu(o3)                                        # (Fp, HW) f32
    build_stack(a_o3, K1, Fp)
    o7 = jnp.dot(w2_ref[...], im_ref[...],                       # conv2: one K=25*(Cp+Fp) dot
                 preferred_element_type=jnp.float32) + b2_ref[...]
    a_o7 = norm_prelu(o7)                                        # (Fp, HW) f32
    cat = jnp.concatenate([a_x, a_o3, a_o7], axis=0)             # (Cp+2Fp, HW) f32
    out_ref[0] = jnp.dot(w3_ref[...], cat.astype(w3_ref.dtype),  # conv3 (1x1): one dot
                         preferred_element_type=jnp.float32) + b3_ref[...]


# ---------------------------------------------------------------------------
# Wrapper: layout plumbing (masks, channel padding, lane-dense weights) + pallas_call
# ---------------------------------------------------------------------------
def dense_block_forward(x, p):
    N, C, H, W = x.shape
    F = p["conv1_w"].shape[0]
    KH, KW = p["conv1_w"].shape[2:]
    HW = H * W
    f32, bf16 = jnp.float32, jnp.bfloat16
    rup = lambda v: ((v + 7) // 8) * 8
    Cp, Fp = rup(C), rup(F)
    ph, pw = (KH - 1) // 2, (KW - 1) // 2

    # Zero-padding boundary masks per tap (lane = h*W + w); identical across batch
    # elements and across both 5x5 convs, so they are baked as a constant input.
    hh = np.arange(HW) // W
    ww = np.arange(HW) % W
    masks_np = np.zeros((KH * KW, 1, HW), np.float32)
    for ki in range(KH):
        for kj in range(KW):
            di, dj = ki - ph, kj - pw
            masks_np[ki * KW + kj, 0] = ((hh + di >= 0) & (hh + di < H) &
                                         (ww + dj >= 0) & (ww + dj < W))
    masks = jnp.asarray(masks_np)

    # Activations: (N, Cp, HW); zero-padded channels stay zero through norm/PReLU and
    # only ever meet zero weight columns, so they are inert.
    x2 = jnp.pad(x.reshape(N, C, HW).astype(f32), ((0, 0), (0, Cp - C), (0, 0)))
    alpha = jnp.asarray(p["prelu_alpha"], f32).reshape(1, 1)

    # Weights: lane-dense (Fp, KH*KW*Ci_pad), column index = tap*Ci_pad + ci, matching
    # the im2col stack row order; conv2/conv3 weights pre-concatenated along Cin.
    def flat_taps(w, ci_pad):
        co, ci = w.shape[:2]
        wp = jnp.pad(w.astype(f32), ((0, Fp - co), (0, ci_pad - ci), (0, 0), (0, 0)))
        return jnp.transpose(wp, (0, 2, 3, 1)).reshape(Fp, KH * KW * ci_pad)

    w1f = flat_taps(p["conv1_w"], Cp).astype(bf16)                      # (Fp, 25*Cp)
    w2f = jnp.concatenate([flat_taps(p["conv2_w"][:, :C], Cp),          # x part of cat
                           flat_taps(p["conv2_w"][:, C:], Fp)],         # o3 part of cat
                          axis=1).astype(bf16)                          # (Fp, 25*(Cp+Fp))
    w3 = p["conv3_w"][:, :, 0, 0].astype(f32)                           # (F, C+2F)
    pad3 = lambda a, cpad: jnp.pad(a, ((0, Fp - F), (0, cpad - a.shape[1])))
    w3f = jnp.concatenate([pad3(w3[:, :C], Cp),
                           pad3(w3[:, C:C + F], Fp),
                           pad3(w3[:, C + F:], Fp)], axis=1).astype(bf16)  # (Fp, Cp+2Fp)
    pb = lambda b: jnp.pad(b.astype(f32), (0, Fp - F)).reshape(Fp, 1)
    b1, b2, b3 = pb(p["conv1_b"]), pb(p["conv2_b"]), pb(p["conv3_b"])

    full = lambda a: pl.BlockSpec(a.shape, lambda n: (0,) * a.ndim)

    out = pl.pallas_call(
        functools.partial(_dense_block_kernel,
                          H=H, W=W, KH=KH, KW=KW, Cp=Cp, Fp=Fp),
        out_shape=jax.ShapeDtypeStruct((N, Fp, HW), f32),
        grid=(N,),
        in_specs=[
            pl.BlockSpec(memory_space=pltpu.MemorySpace.SMEM),   # alpha (1,1)
            full(masks),                                         # (25,1,HW) masks
            pl.BlockSpec((1, Cp, HW), lambda n: (n, 0, 0)),      # x, per batch element
            full(w1f), full(w2f), full(w3f),
            full(b1), full(b2), full(b3),
        ],
        out_specs=pl.BlockSpec((1, Fp, HW), lambda n: (n, 0, 0)),
        scratch_shapes=[pltpu.VMEM((KH * KW * (Cp + Fp), HW), bf16)],  # im2col stack
        compiler_params=pltpu.CompilerParams(
            dimension_semantics=("parallel",)),                  # v7x: 2 TCs split N
    )(alpha, masks, x2, w1f, w2f, w3f, b1, b2, b3)
    return out[:, :F].reshape(N, F, H, W)


# ---------------------------------------------------------------------------
# Params + plain-numpy reference (for correctness checking only)
# ---------------------------------------------------------------------------
def init_params(key, num_channels, num_filters, kh, kw):
    c1_in = num_channels
    c2_in = num_channels + num_filters
    c3_in = num_channels + 2 * num_filters
    ks = jax.random.split(key, 6)
    s = 0.1
    return {
        "conv1_w": s * jax.random.normal(ks[0], (num_filters, c1_in, kh, kw), jnp.float32),
        "conv1_b": s * jax.random.normal(ks[1], (num_filters,), jnp.float32),
        "conv2_w": s * jax.random.normal(ks[2], (num_filters, c2_in, kh, kw), jnp.float32),
        "conv2_b": s * jax.random.normal(ks[3], (num_filters,), jnp.float32),
        "conv3_w": s * jax.random.normal(ks[4], (num_filters, c3_in, 1, 1), jnp.float32),
        "conv3_b": s * jax.random.normal(ks[5], (num_filters,), jnp.float32),
        "prelu_alpha": 0.25,                                     # nn.PReLU() default
    }


def _ref_forward_np(x, p):
    def inorm(a):
        m = a.mean(axis=(2, 3), keepdims=True)
        v = a.var(axis=(2, 3), keepdims=True)
        return (a - m) / np.sqrt(v + EPS)

    def prelu(a, al):
        return np.where(a >= 0, a, al * a)

    def conv(a, w, b):
        Nn, _, Hh, Ww = a.shape
        Co, _, kh, kw = w.shape
        ph, pw = (kh - 1) // 2, (kw - 1) // 2
        ap = np.pad(a, ((0, 0), (0, 0), (ph, ph), (pw, pw)))
        out = np.zeros((Nn, Co, Hh, Ww), np.float32)
        for ki in range(kh):
            for kj in range(kw):
                out += np.einsum("oc,nchw->nohw", w[:, :, ki, kj],
                                 ap[:, :, ki:ki + Hh, kj:kj + Ww])
        return out + b.reshape(1, Co, 1, 1)

    al = float(p["prelu_alpha"])
    o2 = prelu(inorm(x), al)
    o3 = conv(o2, p["conv1_w"], p["conv1_b"])
    o6 = prelu(inorm(np.concatenate([x, o3], axis=1)), al)
    o7 = conv(o6, p["conv2_w"], p["conv2_b"])
    o10 = prelu(inorm(np.concatenate([x, o3, o7], axis=1)), al)
    return conv(o10, p["conv3_w"], p["conv3_b"])


if __name__ == "__main__":
    key = jax.random.PRNGKey(0)
    k_x, k_p = jax.random.split(key)

    N, C, H, W = 2, 4, 16, 16
    F, KH, KW = 8, 5, 5

    x = jax.random.normal(k_x, (N, C, H, W), jnp.float32)
    params = init_params(k_p, C, F, KH, KW)

    out = jax.jit(dense_block_forward)(x, params)
    out = jax.block_until_ready(out)

    assert out.shape == (N, F, H, W)
    assert out.dtype == jnp.float32

    ref = _ref_forward_np(np.asarray(x, np.float32),
                          {k: np.asarray(v, np.float32) for k, v in params.items()})
    # Tolerance sized for bf16 MXU operands with f32 accumulation vs. the fp32 reference.
    np.testing.assert_allclose(np.asarray(out), ref, rtol=2e-2, atol=3e-2)

    print("KERNEL_OK")
</pallas_src>

<mosaic_0001>
module attributes {stable_mosaic.version = 11 : i64} {
  func.func @_dense_block_kernel(%arg0: i32, %arg1: memref<1x1xf32, #tpu.memory_space<smem>>, %arg2: memref<25x1x256xf32, #tpu.memory_space<vmem>>, %arg3: memref<1x8x256xf32, #tpu.memory_space<vmem>>, %arg4: memref<8x200xbf16, #tpu.memory_space<vmem>>, %arg5: memref<8x400xbf16, #tpu.memory_space<vmem>>, %arg6: memref<8x24xbf16, #tpu.memory_space<vmem>>, %arg7: memref<8x1xf32, #tpu.memory_space<vmem>>, %arg8: memref<8x1xf32, #tpu.memory_space<vmem>>, %arg9: memref<8x1xf32, #tpu.memory_space<vmem>>, %arg10: memref<1x8x256xf32, #tpu.memory_space<vmem>>, %arg11: memref<400x256xbf16, #tpu.memory_space<vmem>>) attributes {dimension_semantics = [#tpu.dimension_semantics<parallel>], iteration_bounds = array<i64: 2>, scalar_prefetch = 0 : i64, scratch_operands = 1 : i64, tpu.core_type = #tpu.core_type<tc>, window_params = [{transform_indices = @transform_0, window_bounds = array<i64: 1, 1>}, {pipeline_mode = #tpu.pipeline_mode<synchronous>, transform_indices = @transform_1, window_bounds = array<i64: 25, 1, 256>}, {transform_indices = @transform_2, window_bounds = array<i64: 1, 8, 256>}, {pipeline_mode = #tpu.pipeline_mode<synchronous>, transform_indices = @transform_3, window_bounds = array<i64: 8, 200>}, {pipeline_mode = #tpu.pipeline_mode<synchronous>, transform_indices = @transform_4, window_bounds = array<i64: 8, 400>}, {pipeline_mode = #tpu.pipeline_mode<synchronous>, transform_indices = @transform_5, window_bounds = array<i64: 8, 24>}, {pipeline_mode = #tpu.pipeline_mode<synchronous>, transform_indices = @transform_6, window_bounds = array<i64: 8, 1>}, {pipeline_mode = #tpu.pipeline_mode<synchronous>, transform_indices = @transform_7, window_bounds = array<i64: 8, 1>}, {pipeline_mode = #tpu.pipeline_mode<synchronous>, transform_indices = @transform_8, window_bounds = array<i64: 8, 1>}, {transform_indices = @transform_9, window_bounds = array<i64: 1, 8, 256>}]} {
    %c0 = arith.constant 0 : index
    %c0_0 = arith.constant 0 : index
    %0 = memref.load %arg1[%c0, %c0_0] : memref<1x1xf32, #tpu.memory_space<smem>>
    %c0_1 = arith.constant 0 : index
    %c0_2 = arith.constant 0 : index
    %c0_3 = arith.constant 0 : index
    %1 = vector.load %arg3[%c0_1, %c0_2, %c0_3] : memref<1x8x256xf32, #tpu.memory_space<vmem>>, vector<1x8x256xf32>
    %2 = vector.shape_cast %1 : vector<1x8x256xf32> to vector<8x256xf32>
    %cst = arith.constant dense<0.000000e+00> : vector<8xf32>
    %3 = vector.multi_reduction <add>, %2, %cst [1] : vector<8x256xf32> to vector<8xf32>
    %4 = vector.shape_cast %3 : vector<8xf32> to vector<8x1xf32>
    %cst_4 = arith.constant 2.560000e+02 : f32
    %5 = vector.broadcast %cst_4 : f32 to vector<8x1xf32>
    %6 = arith.divf %4, %5 : vector<8x1xf32>
    %7 = vector.broadcast %6 : vector<8x1xf32> to vector<8x256xf32>
    %8 = arith.subf %2, %7 : vector<8x256xf32>
    %9 = arith.mulf %8, %8 : vector<8x256xf32>
    %cst_5 = arith.constant dense<0.000000e+00> : vector<8xf32>
    %10 = vector.multi_reduction <add>, %9, %cst_5 [1] : vector<8x256xf32> to vector<8xf32>
    %11 = vector.shape_cast %10 : vector<8xf32> to vector<8x1xf32>
    %cst_6 = arith.constant 2.560000e+02 : f32
    %12 = vector.broadcast %cst_6 : f32 to vector<8x1xf32>
    %13 = arith.divf %11, %12 : vector<8x1xf32>
    %cst_7 = arith.constant 9.99999974E-6 : f32
    %14 = vector.broadcast %cst_7 : f32 to vector<8x1xf32>
    %15 = arith.addf %13, %14 : vector<8x1xf32>
    %16 = math.rsqrt %15 : vector<8x1xf32>
    %17 = vector.broadcast %16 : vector<8x1xf32> to vector<8x256xf32>
    %18 = arith.mulf %8, %17 : vector<8x256xf32>
    %cst_8 = arith.constant 0.000000e+00 : f32
    %19 = vector.broadcast %cst_8 : f32 to vector<8x256xf32>
    %20 = arith.cmpf oge, %18, %19 : vector<8x256xf32>
    %21 = vector.broadcast %0 : f32 to vector<8x256xf32>
    %22 = arith.mulf %21, %18 : vector<8x256xf32>
    %23 = arith.select %20, %18, %22 : vector<8x256xi1>, vector<8x256xf32>
    %c34_i32 = arith.constant 34 : i32
    %24 = tpu.dynamic_rotate %23 by %c34_i32 dim 1 : vector<8x256xf32>, i32 -> vector<8x256xf32>
    %c0_9 = arith.constant 0 : index
    %c0_10 = arith.constant 0 : index
    %c0_11 = arith.constant 0 : index
    %25 = vector.load %arg2[%c0_9, %c0_10, %c0_11] : memref<25x1x256xf32, #tpu.memory_space<vmem>>, vector<1x1x256xf32>
    %26 = vector.shape_cast %25 : vector<1x1x256xf32> to vector<1x256xf32>
    %27 = vector.broadcast %26 : vector<1x256xf32> to vector<8x256xf32>
    %28 = arith.mulf %24, %27 : vector<8x256xf32>
    %29 = arith.truncf %28 : vector<8x256xf32> to vector<8x256xbf16>
    %c0_12 = arith.constant 0 : index
    %c0_13 = arith.constant 0 : index
    %30 = vector.load %arg11[%c0_12, %c0_13] : memref<400x256xbf16, #tpu.memory_space<vmem>>, vector<8x256xbf16>
    tpu.vector_store %arg11[%c0_12, %c0_13], %29 {strides = array<i32>} : memref<400x256xbf16, #tpu.memory_space<vmem>>, vector<8x256xbf16>,
    %c33_i32 = arith.constant 33 : i32
    %31 = tpu.dynamic_rotate %23 by %c33_i32 dim 1 : vector<8x256xf32>, i32 -> vector<8x256xf32>
    %c1 = arith.constant 1 : index
    %c0_14 = arith.constant 0 : index
    %c0_15 = arith.constant 0 : index
    %32 = vector.load %arg2[%c1, %c0_14, %c0_15] : memref<25x1x256xf32, #tpu.memory_space<vmem>>, vector<1x1x256xf32>
    %33 = vector.shape_cast %32 : vector<1x1x256xf32> to vector<1x256xf32>
    %34 = vector.broadcast %33 : vector<1x256xf32> to vector<8x256xf32>
    %35 = arith.mulf %31, %34 : vector<8x256xf32>
    %36 = arith.truncf %35 : vector<8x256xf32> to vector<8x256xbf16>
    %c8 = arith.constant 8 : index
    %c0_16 = arith.constant 0 : index
    %37 = vector.load %arg11[%c8, %c0_16] : memref<400x256xbf16, #tpu.memory_space<vmem>>, vector<8x256xbf16>
    tpu.vector_store %arg11[%c8, %c0_16], %36 {strides = array<i32>} : memref<400x256xbf16, #tpu.memory_space<vmem>>, vector<8x256xbf16>,
    %c32_i32 = arith.constant 32 : i32
    %38 = tpu.dynamic_rotate %23 by %c32_i32 dim 1 : vector<8x256xf32>, i32 -> vector<8x256xf32>
    %c2 = arith.constant 2 : index
    %c0_17 = arith.constant 0 : index
    %c0_18 = arith.constant 0 : index
    %39 = vector.load %arg2[%c2, %c0_17, %c0_18] : memref<25x1x256xf32, #tpu.memory_space<vmem>>, vector<1x1x256xf32>
    %40 = vector.shape_cast %39 : vector<1x1x256xf32> to vector<1x256xf32>
    %41 = vector.broadcast %40 : vector<1x256xf32> to vector<8x256xf32>
    %42 = arith.mulf %38, %41 : vector<8x256xf32>
    %43 = arith.truncf %42 : vector<8x256xf32> to vector<8x256xbf16>
    %c16 = arith.constant 16 : index
    %c0_19 = arith.constant 0 : index
    %44 = vector.load %arg11[%c16, %c0_19] : memref<400x256xbf16, #tpu.memory_space<vmem>>, vector<8x256xbf16>
    tpu.vector_store %arg11[%c16, %c0_19], %43 {strides = array<i32>} : memref<400x256xbf16, #tpu.memory_space<vmem>>, vector<8x256xbf16>,
    %c31_i32 = arith.constant 31 : i32
    %45 = tpu.dynamic_rotate %23 by %c31_i32 dim 1 : vector<8x256xf32>, i32 -> vector<8x256xf32>
    %c3 = arith.constant 3 : index
    %c0_20 = arith.constant 0 : index
    %c0_21 = arith.constant 0 : index
    %46 = vector.load %arg2[%c3, %c0_20, %c0_21] : memref<25x1x256xf32, #tpu.memory_space<vmem>>, vector<1x1x256xf32>
    %47 = vector.shape_cast %46 : vector<1x1x256xf32> to vector<1x256xf32>
    %48 = vector.broadcast %47 : vector<1x256xf32> to vector<8x256xf32>
    %49 = arith.mulf %45, %48 : vector<8x256xf32>
    %50 = arith.truncf %49 : vector<8x256xf32> to vector<8x256xbf16>
    %c24 = arith.constant 24 : index
    %c0_22 = arith.constant 0 : index
    %51 = vector.load %arg11[%c24, %c0_22] : memref<400x256xbf16, #tpu.memory_space<vmem>>, vector<8x256xbf16>
    tpu.vector_store %arg11[%c24, %c0_22], %50 {strides = array<i32>} : memref<400x256xbf16, #tpu.memory_space<vmem>>, vector<8x256xbf16>,
    %c30_i32 = arith.constant 30 : i32
    %52 = tpu.dynamic_rotate %23 by %c30_i32 dim 1 : vector<8x256xf32>, i32 -> vector<8x256xf32>
    %c4 = arith.constant 4 : index
    %c0_23 = arith.constant 0 : index
    %c0_24 = arith.constant 0 : index
    %53 = vector.load %arg2[%c4, %c0_23, %c0_24] : memref<25x1x256xf32, #tpu.memory_space<vmem>>, vector<1x1x256xf32>
    %54 = vector.shape_cast %53 : vector<1x1x256xf32> to vector<1x256xf32>
    %55 = vector.broadcast %54 : vector<1x256xf32> to vector<8x256xf32>
    %56 = arith.mulf %52, %55 : vector<8x256xf32>
    %57 = arith.truncf %56 : vector<8x256xf32> to vector<8x256xbf16>
    %c32 = arith.constant 32 : index
    %c0_25 = arith.constant 0 : index
    %58 = vector.load %arg11[%c32, %c0_25] : memref<400x256xbf16, #tpu.memory_space<vmem>>, vector<8x256xbf16>
    tpu.vector_store %arg11[%c32, %c0_25], %57 {strides = array<i32>} : memref<400x256xbf16, #tpu.memory_space<vmem>>, vector<8x256xbf16>,
    %c18_i32 = arith.constant 18 : i32
    %59 = tpu.dynamic_rotate %23 by %c18_i32 dim 1 : vector<8x256xf32>, i32 -> vector<8x256xf32>
    %c5 = arith.constant 5 : index
    %c0_26 = arith.constant 0 : index
    %c0_27 = arith.constant 0 : index
    %60 = vector.load %arg2[%c5, %c0_26, %c0_27] : memref<25x1x256xf32, #tpu.memory_space<vmem>>, vector<1x1x256xf32>
    %61 = vector.shape_cast %60 : vector<1x1x256xf32> to vector<1x256xf32>
    %62 = vector.broadcast %61 : vector<1x256xf32> to vector<8x256xf32>
    %63 = arith.mulf %59, %62 : vector<8x256xf32>
    %64 = arith.truncf %63 : vector<8x256xf32> to vector<8x256xbf16>
    %c40 = arith.constant 40 : index
    %c0_28 = arith.constant 0 : index
    %65 = vector.load %arg11[%c40, %c0_28] : memref<400x256xbf16, #tpu.memory_space<vmem>>, vector<8x256xbf16>
    tpu.vector_store %arg11[%c40, %c0_28], %64 {strides = array<i32>} : memref<400x256xbf16, #tpu.memory_space<vmem>>, vector<8x256xbf16>,
    %c17_i32 = arith.constant 17 : i32
    %66 = tpu.dynamic_rotate %23 by %c17_i32 dim 1 : vector<8x256xf32>, i32 -> vector<8x256xf32>
    %c6 = arith.constant 6 : index
    %c0_29 = arith.constant 0 : index
    %c0_30 = arith.constant 0 : index
    %67 = vector.load %arg2[%c6, %c0_29, %c0_30] : memref<25x1x256xf32, #tpu.memory_space<vmem>>, vector<1x1x256xf32>
    %68 = vector.shape_cast %67 : vector<1x1x256xf32> to vector<1x256xf32>
    %69 = vector.broadcast %68 : vector<1x256xf32> to vector<8x256xf32>
    %70 = arith.mulf %66, %69 : vector<8x256xf32>
    %71 = arith.truncf %70 : vector<8x256xf32> to vector<8x256xbf16>
    %c48 = arith.constant 48 : index
    %c0_31 = arith.constant 0 : index
    %72 = vector.load %arg11[%c48, %c0_31] : memref<400x256xbf16, #tpu.memory_space<vmem>>, vector<8x256xbf16>
    tpu.vector_store %arg11[%c48, %c0_31], %71 {strides = array<i32>} : memref<400x256xbf16, #tpu.memory_space<vmem>>, vector<8x256xbf16>,
    %c16_i32 = arith.constant 16 : i32
    %73 = tpu.dynamic_rotate %23 by %c16_i32 dim 1 : vector<8x256xf32>, i32 -> vector<8x256xf32>
    %c7 = arith.constant 7 : index
    %c0_32 = arith.constant 0 : index
    %c0_33 = arith.constant 0 : index
    %74 = vector.load %arg2[%c7, %c0_32, %c0_33] : memref<25x1x256xf32, #tpu.memory_space<vmem>>, vector<1x1x256xf32>
    %75 = vector.shape_cast %74 : vector<1x1x256xf32> to vector<1x256xf32>
    %76 = vector.broadcast %75 : vector<1x256xf32> to vector<8x256xf32>
    %77 = arith.mulf %73, %76 : vector<8x256xf32>
    %78 = arith.truncf %77 : vector<8x256xf32> to vector<8x256xbf16>
    %c56 = arith.constant 56 : index
    %c0_34 = arith.constant 0 : index
    %79 = vector.load %arg11[%c56, %c0_34] : memref<400x256xbf16, #tpu.memory_space<vmem>>, vector<8x256xbf16>
    tpu.vector_store %arg11[%c56, %c0_34], %78 {strides = array<i32>} : memref<400x256xbf16, #tpu.memory_space<vmem>>, vector<8x256xbf16>,
    %c15_i32 = arith.constant 15 : i32
    %80 = tpu.dynamic_rotate %23 by %c15_i32 dim 1 : vector<8x256xf32>, i32 -> vector<8x256xf32>
    %c8_35 = arith.constant 8 : index
    %c0_36 = arith.constant 0 : index
    %c0_37 = arith.constant 0 : index
    %81 = vector.load %arg2[%c8_35, %c0_36, %c0_37] : memref<25x1x256xf32, #tpu.memory_space<vmem>>, vector<1x1x256xf32>
    %82 = vector.shape_cast %81 : vector<1x1x256xf32> to vector<1x256xf32>
    %83 = vector.broadcast %82 : vector<1x256xf32> to vector<8x256xf32>
    %84 = arith.mulf %80, %83 : vector<8x256xf32>
    %85 = arith.truncf %84 : vector<8x256xf32> to vector<8x256xbf16>
    %c64 = arith.constant 64 : index
    %c0_38 = arith.constant 0 : index
    %86 = vector.load %arg11[%c64, %c0_38] : memref<400x256xbf16, #tpu.memory_space<vmem>>, vector<8x256xbf16>
    tpu.vector_store %arg11[%c64, %c0_38], %85 {strides = array<i32>} : memref<400x256xbf16, #tpu.memory_space<vmem>>, vector<8x256xbf16>,
    %c14_i32 = arith.constant 14 : i32
    %87 = tpu.dynamic_rotate %23 by %c14_i32 dim 1 : vector<8x256xf32>, i32 -> vector<8x256xf32>
    %c9 = arith.constant 9 : index
    %c0_39 = arith.constant 0 : index
    %c0_40 = arith.constant 0 : index
    %88 = vector.load %arg2[%c9, %c0_39, %c0_40] : memref<25x1x256xf32, #tpu.memory_space<vmem>>, vector<1x1x256xf32>
    %89 = vector.shape_cast %88 : vector<1x1x256xf32> to vector<1x256xf32>
    %90 = vector.broadcast %89 : vector<1x256xf32> to vector<8x256xf32>
    %91 = arith.mulf %87, %90 : vector<8x256xf32>
    %92 = arith.truncf %91 : vector<8x256xf32> to vector<8x256xbf16>
    %c72 = arith.constant 72 : index
    %c0_41 = arith.constant 0 : index
    %93 = vector.load %arg11[%c72, %c0_41] : memref<400x256xbf16, #tpu.memory_space<vmem>>, vector<8x256xbf16>
    tpu.vector_store %arg11[%c72, %c0_41], %92 {strides = array<i32>} : memref<400x256xbf16, #tpu.memory_space<vmem>>, vector<8x256xbf16>,
    %c2_i32 = arith.constant 2 : i32
    %94 = tpu.dynamic_rotate %23 by %c2_i32 dim 1 : vector<8x256xf32>, i32 -> vector<8x256xf32>
    %c10 = arith.constant 10 : index
    %c0_42 = arith.constant 0 : index
    %c0_43 = arith.constant 0 : index
    %95 = vector.load %arg2[%c10, %c0_42, %c0_43] : memref<25x1x256xf32, #tpu.memory_space<vmem>>, vector<1x1x256xf32>
    %96 = vector.shape_cast %95 : vector<1x1x256xf32> to vector<1x256xf32>
    %97 = vector.broadcast %96 : vector<1x256xf32> to vector<8x256xf32>
    %98 = arith.mulf %94, %97 : vector<8x256xf32>
    %99 = arith.truncf %98 : vector<8x256xf32> to vector<8x256xbf16>
    %c80 = arith.constant 80 : index
    %c0_44 = arith.constant 0 : index
    %100 = vector.load %arg11[%c80, %c0_44] : memref<400x256xbf16, #tpu.memory_space<vmem>>, vector<8x256xbf16>
    tpu.vector_store %arg11[%c80, %c0_44], %99 {strides = array<i32>} : memref<400x256xbf16, #tpu.memory_space<vmem>>, vector<8x256xbf16>,
    %c1_i32 = arith.constant 1 : i32
    %101 = tpu.dynamic_rotate %23 by %c1_i32 dim 1 : vector<8x256xf32>, i32 -> vector<8x256xf32>
    %c11 = arith.constant 11 : index
    %c0_45 = arith.constant 0 : index
    %c0_46 = arith.constant 0 : index
    %102 = vector.load %arg2[%c11, %c0_45, %c0_46] : memref<25x1x256xf32, #tpu.memory_space<vmem>>, vector<1x1x256xf32>
    %103 = vector.shape_cast %102 : vector<1x1x256xf32> to vector<1x256xf32>
    %104 = vector.broadcast %103 : vector<1x256xf32> to vector<8x256xf32>
    %105 = arith.mulf %101, %104 : vector<8x256xf32>
    %106 = arith.truncf %105 : vector<8x256xf32> to vector<8x256xbf16>
    %c88 = arith.constant 88 : index
    %c0_47 = arith.constant 0 : index
    %107 = vector.load %arg11[%c88, %c0_47] : memref<400x256xbf16, #tpu.memory_space<vmem>>, vector<8x256xbf16>
    tpu.vector_store %arg11[%c88, %c0_47], %106 {strides = array<i32>} : memref<400x256xbf16, #tpu.memory_space<vmem>>, vector<8x256xbf16>,
    %c12 = arith.constant 12 : index
    %c0_48 = arith.constant 0 : index
    %c0_49 = arith.constant 0 : index
    %108 = vector.load %arg2[%c12, %c0_48, %c0_49] : memref<25x1x256xf32, #tpu.memory_space<vmem>>, vector<1x1x256xf32>
    %109 = vector.shape_cast %108 : vector<1x1x256xf32> to vector<1x256xf32>
    %110 = vector.broadcast %109 : vector<1x256xf32> to vector<8x256xf32>
    %111 = arith.mulf %23, %110 : vector<8x256xf32>
    %112 = arith.truncf %111 : vector<8x256xf32> to vector<8x256xbf16>
    %c96 = arith.constant 96 : index
    %c0_50 = arith.constant 0 : index
    %113 = vector.load %arg11[%c96, %c0_50] : memref<400x256xbf16, #tpu.memory_space<vmem>>, vector<8x256xbf16>
    tpu.vector_store %arg11[%c96, %c0_50], %112 {strides = array<i32>} : memref<400x256xbf16, #tpu.memory_space<vmem>>, vector<8x256xbf16>,
    %c255_i32 = arith.constant 255 : i32
    %114 = tpu.dynamic_rotate %23 by %c255_i32 dim 1 : vector<8x256xf32>, i32 -> vector<8x256xf32>
    %c13 = arith.constant 13 : index
    %c0_51 = arith.constant 0 : index
    %c0_52 = arith.constant 0 : index
    %115 = vector.load %arg2[%c13, %c0_51, %c0_52] : memref<25x1x256xf32, #tpu.memory_space<vmem>>, vector<1x1x256xf32>
    %116 = vector.shape_cast %115 : vector<1x1x256xf32> to vector<1x256xf32>
    %117 = vector.broadcast %116 : vector<1x256xf32> to vector<8x256xf32>
    %118 = arith.mulf %114, %117 : vector<8x256xf32>
    %119 = arith.truncf %118 : vector<8x256xf32> to vector<8x256xbf16>
    %c104 = arith.constant 104 : index
    %c0_53 = arith.constant 0 : index
    %120 = vector.load %arg11[%c104, %c0_53] : memref<400x256xbf16, #tpu.memory_space<vmem>>, vector<8x256xbf16>
    tpu.vector_store %arg11[%c104, %c0_53], %119 {strides = array<i32>} : memref<400x256xbf16, #tpu.memory_space<vmem>>, vector<8x256xbf16>,
    %c254_i32 = arith.constant 254 : i32
    %121 = tpu.dynamic_rotate %23 by %c254_i32 dim 1 : vector<8x256xf32>, i32 -> vector<8x256xf32>
    %c14 = arith.constant 14 : index
    %c0_54 = arith.constant 0 : index
    %c0_55 = arith.constant 0 : index
    %122 = vector.load %arg2[%c14, %c0_54, %c0_55] : memref<25x1x256xf32, #tpu.memory_space<vmem>>, vector<1x1x256xf32>
    %123 = vector.shape_cast %122 : vector<1x1x256xf32> to vector<1x256xf32>
    %124 = vector.broadcast %123 : vector<1x256xf32> to vector<8x256xf32>
    %125 = arith.mulf %121, %124 : vector<8x256xf32>
    %126 = arith.truncf %125 : vector<8x256xf32> to vector<8x256xbf16>
    %c112 = arith.constant 112 : index
    %c0_56 = arith.constant 0 : index
    %127 = vector.load %arg11[%c112, %c0_56] : memref<400x256xbf16, #tpu.memory_space<vmem>>, vector<8x256xbf16>
    tpu.vector_store %arg11[%c112, %c0_56], %126 {strides = array<i32>} : memref<400x256xbf16, #tpu.memory_space<vmem>>, vector<8x256xbf16>,
    %c242_i32 = arith.constant 242 : i32
    %128 = tpu.dynamic_rotate %23 by %c242_i32 dim 1 : vector<8x256xf32>, i32 -> vector<8x256xf32>
    %c15 = arith.constant 15 : index
    %c0_57 = arith.constant 0 : index
    %c0_58 = arith.constant 0 : index
    %129 = vector.load %arg2[%c15, %c0_57, %c0_58] : memref<25x1x256xf32, #tpu.memory_space<vmem>>, vector<1x1x256xf32>
    %130 = vector.shape_cast %129 : vector<1x1x256xf32> to vector<1x256xf32>
    %131 = vector.broadcast %130 : vector<1x256xf32> to vector<8x256xf32>
    %132 = arith.mulf %128, %131 : vector<8x256xf32>
    %133 = arith.truncf %132 : vector<8x256xf32> to vector<8x256xbf16>
    %c120 = arith.constant 120 : index
    %c0_59 = arith.constant 0 : index
    %134 = vector.load %arg11[%c120, %c0_59] : memref<400x256xbf16, #tpu.memory_space<vmem>>, vector<8x256xbf16>
    tpu.vector_store %arg11[%c120, %c0_59], %133 {strides = array<i32>} : memref<400x256xbf16, #tpu.memory_space<vmem>>, vector<8x256xbf16>,
    %c241_i32 = arith.constant 241 : i32
    %135 = tpu.dynamic_rotate %23 by %c241_i32 dim 1 : vector<8x256xf32>, i32 -> vector<8x256xf32>
    %c16_60 = arith.constant 16 : index
    %c0_61 = arith.constant 0 : index
    %c0_62 = arith.constant 0 : index
    %136 = vector.load %arg2[%c16_60, %c0_61, %c0_62] : memref<25x1x256xf32, #tpu.memory_space<vmem>>, vector<1x1x256xf32>
    %137 = vector.shape_cast %136 : vector<1x1x256xf32> to vector<1x256xf32>
    %138 = vector.broadcast %137 : vector<1x256xf32> to vector<8x256xf32>
    %139 = arith.mulf %135, %138 : vector<8x256xf32>
    %140 = arith.truncf %139 : vector<8x256xf32> to vector<8x256xbf16>
    %c128 = arith.constant 128 : index
    %c0_63 = arith.constant 0 : index
    %141 = vector.load %arg11[%c128, %c0_63] : memref<400x256xbf16, #tpu.memory_space<vmem>>, vector<8x256xbf16>
    tpu.vector_store %arg11[%c128, %c0_63], %140 {strides = array<i32>} : memref<400x256xbf16, #tpu.memory_space<vmem>>, vector<8x256xbf16>,
    %c240_i32 = arith.constant 240 : i32
    %142 = tpu.dynamic_rotate %23 by %c240_i32 dim 1 : vector<8x256xf32>, i32 -> vector<8x256xf32>
    %c17 = arith.constant 17 : index
    %c0_64 = arith.constant 0 : index
    %c0_65 = arith.constant 0 : index
    %143 = vector.load %arg2[%c17, %c0_64, %c0_65] : memref<25x1x256xf32, #tpu.memory_space<vmem>>, vector<1x1x256xf32>
    %144 = vector.shape_cast %143 : vector<1x1x256xf32> to vector<1x256xf32>
    %145 = vector.broadcast %144 : vector<1x256xf32> to vector<8x256xf32>
    %146 = arith.mulf %142, %145 : vector<8x256xf32>
    %147 = arith.truncf %146 : vector<8x256xf32> to vector<8x256xbf16>
    %c136 = arith.constant 136 : index
    %c0_66 = arith.constant 0 : index
    %148 = vector.load %arg11[%c136, %c0_66] : memref<400x256xbf16, #tpu.memory_space<vmem>>, vector<8x256xbf16>
    tpu.vector_store %arg11[%c136, %c0_66], %147 {strides = array<i32>} : memref<400x256xbf16, #tpu.memory_space<vmem>>, vector<8x256xbf16>,
    %c239_i32 = arith.constant 239 : i32
    %149 = tpu.dynamic_rotate %23 by %c239_i32 dim 1 : vector<8x256xf32>, i32 -> vector<8x256xf32>
    %c18 = arith.constant 18 : index
    %c0_67 = arith.constant 0 : index
    %c0_68 = arith.constant 0 : index
    %150 = vector.load %arg2[%c18, %c0_67, %c0_68] : memref<25x1x256xf32, #tpu.memory_space<vmem>>, vector<1x1x256xf32>
    %151 = vector.shape_cast %150 : vector<1x1x256xf32> to vector<1x256xf32>
    %152 = vector.broadcast %151 : vector<1x256xf32> to vector<8x256xf32>
    %153 = arith.mulf %149, %152 : vector<8x256xf32>
    %154 = arith.truncf %153 : vector<8x256xf32> to vector<8x256xbf16>
    %c144 = arith.constant 144 : index
    %c0_69 = arith.constant 0 : index
    %155 = vector.load %arg11[%c144, %c0_69] : memref<400x256xbf16, #tpu.memory_space<vmem>>, vector<8x256xbf16>
    tpu.vector_store %arg11[%c144, %c0_69], %154 {strides = array<i32>} : memref<400x256xbf16, #tpu.memory_space<vmem>>, vector<8x256xbf16>,
    %c238_i32 = arith.constant 238 : i32
    %156 = tpu.dynamic_rotate %23 by %c238_i32 dim 1 : vector<8x256xf32>, i32 -> vector<8x256xf32>
    %c19 = arith.constant 19 : index
    %c0_70 = arith.constant 0 : index
    %c0_71 = arith.constant 0 : index
    %157 = vector.load %arg2[%c19, %c0_70, %c0_71] : memref<25x1x256xf32, #tpu.memory_space<vmem>>, vector<1x1x256xf32>
    %158 = vector.shape_cast %157 : vector<1x1x256xf32> to vector<1x256xf32>
    %159 = vector.broadcast %158 : vector<1x256xf32> to vector<8x256xf32>
    %160 = arith.mulf %156, %159 : vector<8x256xf32>
    %161 = arith.truncf %160 : vector<8x256xf32> to vector<8x256xbf16>
    %c152 = arith.constant 152 : index
    %c0_72 = arith.constant 0 : index
    %162 = vector.load %arg11[%c152, %c0_72] : memref<400x256xbf16, #tpu.memory_space<vmem>>, vector<8x256xbf16>
    tpu.vector_store %arg11[%c152, %c0_72], %161 {strides = array<i32>} : memref<400x256xbf16, #tpu.memory_space<vmem>>, vector<8x256xbf16>,
    %c226_i32 = arith.constant 226 : i32
    %163 = tpu.dynamic_rotate %23 by %c226_i32 dim 1 : vector<8x256xf32>, i32 -> vector<8x256xf32>
    %c20 = arith.constant 20 : index
    %c0_73 = arith.constant 0 : index
    %c0_74 = arith.constant 0 : index
    %164 = vector.load %arg2[%c20, %c0_73, %c0_74] : memref<25x1x256xf32, #tpu.memory_space<vmem>>, vector<1x1x256xf32>
    %165 = vector.shape_cast %164 : vector<1x1x256xf32> to vector<1x256xf32>
    %166 = vector.broadcast %165 : vector<1x256xf32> to vector<8x256xf32>
    %167 = arith.mulf %163, %166 : vector<8x256xf32>
    %168 = arith.truncf %167 : vector<8x256xf32> to vector<8x256xbf16>
    %c160 = arith.constant 160 : index
    %c0_75 = arith.constant 0 : index
    %169 = vector.load %arg11[%c160, %c0_75] : memref<400x256xbf16, #tpu.memory_space<vmem>>, vector<8x256xbf16>
    tpu.vector_store %arg11[%c160, %c0_75], %168 {strides = array<i32>} : memref<400x256xbf16, #tpu.memory_space<vmem>>, vector<8x256xbf16>,
    %c225_i32 = arith.constant 225 : i32
    %170 = tpu.dynamic_rotate %23 by %c225_i32 dim 1 : vector<8x256xf32>, i32 -> vector<8x256xf32>
    %c21 = arith.constant 21 : index
    %c0_76 = arith.constant 0 : index
    %c0_77 = arith.constant 0 : index
    %171 = vector.load %arg2[%c21, %c0_76, %c0_77] : memref<25x1x256xf32, #tpu.memory_space<vmem>>, vector<1x1x256xf32>
    %172 = vector.shape_cast %171 : vector<1x1x256xf32> to vector<1x256xf32>
    %173 = vector.broadcast %172 : vector<1x256xf32> to vector<8x256xf32>
    %174 = arith.mulf %170, %173 : vector<8x256xf32>
    %175 = arith.truncf %174 : vector<8x256xf32> to vector<8x256xbf16>
    %c168 = arith.constant 168 : index
    %c0_78 = arith.constant 0 : index
    %176 = vector.load %arg11[%c168, %c0_78] : memref<400x256xbf16, #tpu.memory_space<vmem>>, vector<8x256xbf16>
    tpu.vector_store %arg11[%c168, %c0_78], %175 {strides = array<i32>} : memref<400x256xbf16, #tpu.memory_space<vmem>>, vector<8x256xbf16>,
    %c224_i32 = arith.constant 224 : i32
    %177 = tpu.dynamic_rotate %23 by %c224_i32 dim 1 : vector<8x256xf32>, i32 -> vector<8x256xf32>
    %c22 = arith.constant 22 : index
    %c0_79 = arith.constant 0 : index
    %c0_80 = arith.constant 0 : index
    %178 = vector.load %arg2[%c22, %c0_79, %c0_80] : memref<25x1x256xf32, #tpu.memory_space<vmem>>, vector<1x1x256xf32>
    %179 = vector.shape_cast %178 : vector<1x1x256xf32> to vector<1x256xf32>
    %180 = vector.broadcast %179 : vector<1x256xf32> to vector<8x256xf32>
    %181 = arith.mulf %177, %180 : vector<8x256xf32>
    %182 = arith.truncf %181 : vector<8x256xf32> to vector<8x256xbf16>
    %c176 = arith.constant 176 : index
    %c0_81 = arith.constant 0 : index
    %183 = vector.load %arg11[%c176, %c0_81] : memref<400x256xbf16, #tpu.memory_space<vmem>>, vector<8x256xbf16>
    tpu.vector_store %arg11[%c176, %c0_81], %182 {strides = array<i32>} : memref<400x256xbf16, #tpu.memory_space<vmem>>, vector<8x256xbf16>,
    %c223_i32 = arith.constant 223 : i32
    %184 = tpu.dynamic_rotate %23 by %c223_i32 dim 1 : vector<8x256xf32>, i32 -> vector<8x256xf32>
    %c23 = arith.constant 23 : index
    %c0_82 = arith.constant 0 : index
    %c0_83 = arith.constant 0 : index
    %185 = vector.load %arg2[%c23, %c0_82, %c0_83] : memref<25x1x256xf32, #tpu.memory_space<vmem>>, vector<1x1x256xf32>
    %186 = vector.shape_cast %185 : vector<1x1x256xf32> to vector<1x256xf32>
    %187 = vector.broadcast %186 : vector<1x256xf32> to vector<8x256xf32>
    %188 = arith.mulf %184, %187 : vector<8x256xf32>
    %189 = arith.truncf %188 : vector<8x256xf32> to vector<8x256xbf16>
    %c184 = arith.constant 184 : index
    %c0_84 = arith.constant 0 : index
    %190 = vector.load %arg11[%c184, %c0_84] : memref<400x256xbf16, #tpu.memory_space<vmem>>, vector<8x256xbf16>
    tpu.vector_store %arg11[%c184, %c0_84], %189 {strides = array<i32>} : memref<400x256xbf16, #tpu.memory_space<vmem>>, vector<8x256xbf16>,
    %c222_i32 = arith.constant 222 : i32
    %191 = tpu.dynamic_rotate %23 by %c222_i32 dim 1 : vector<8x256xf32>, i32 -> vector<8x256xf32>
    %c24_85 = arith.constant 24 : index
    %c0_86 = arith.constant 0 : index
    %c0_87 = arith.constant 0 : index
    %192 = vector.load %arg2[%c24_85, %c0_86, %c0_87] : memref<25x1x256xf32, #tpu.memory_space<vmem>>, vector<1x1x256xf32>
    %193 = vector.shape_cast %192 : vector<1x1x256xf32> to vector<1x256xf32>
    %194 = vector.broadcast %193 : vector<1x256xf32> to vector<8x256xf32>
    %195 = arith.mulf %191, %194 : vector<8x256xf32>
    %196 = arith.truncf %195 : vector<8x256xf32> to vector<8x256xbf16>
    %c192 = arith.constant 192 : index
    %c0_88 = arith.constant 0 : index
    %197 = vector.load %arg11[%c192, %c0_88] : memref<400x256xbf16, #tpu.memory_space<vmem>>, vector<8x256xbf16>
    tpu.vector_store %arg11[%c192, %c0_88], %196 {strides = array<i32>} : memref<400x256xbf16, #tpu.memory_space<vmem>>, vector<8x256xbf16>,
    %c0_89 = arith.constant 0 : index
    %c0_90 = arith.constant 0 : index
    %198 = vector.load %arg4[%c0_89, %c0_90] : memref<8x200xbf16, #tpu.memory_space<vmem>>, vector<8x200xbf16>
    %c0_91 = arith.constant 0 : index
    %c0_92 = arith.constant 0 : index
    %199 = vector.load %arg11[%c0_91, %c0_92] : memref<400x256xbf16, #tpu.memory_space<vmem>>, vector<200x256xbf16>
    %cst_93 = arith.constant dense<0.000000e+00> : vector<8x256xf32>
    %200 = tpu.matmul %198, %199, %cst_93 {dimension_numbers = #tpu.dot_dimension_numbers<[1], [0], [0], [1], [0, 0, 1, 1], [], []>} : vector<8x200xbf16>, vector<200x256xbf16>, vector<8x256xf32> -> vector<8x256xf32>
    %c0_94 = arith.constant 0 : index
    %c0_95 = arith.constant 0 : index
    %201 = vector.load %arg7[%c0_94, %c0_95] : memref<8x1xf32, #tpu.memory_space<vmem>>, vector<8x1xf32>
    %202 = vector.broadcast %201 : vector<8x1xf32> to vector<8x256xf32>
    %203 = arith.addf %200, %202 : vector<8x256xf32>
    %cst_96 = arith.constant dense<0.000000e+00> : vector<8xf32>
    %204 = vector.multi_reduction <add>, %203, %cst_96 [1] : vector<8x256xf32> to vector<8xf32>
    %205 = vector.shape_cast %204 : vector<8xf32> to vector<8x1xf32>
    %cst_97 = arith.constant 2.560000e+02 : f32
    %206 = vector.broadcast %cst_97 : f32 to vector<8x1xf32>
    %207 = arith.divf %205, %206 : vector<8x1xf32>
    %208 = vector.broadcast %207 : vector<8x1xf32> to vector<8x256xf32>
    %209 = arith.subf %203, %208 : vector<8x256xf32>
    %210 = arith.mulf %209, %209 : vector<8x256xf32>
    %cst_98 = arith.constant dense<0.000000e+00> : vector<8xf32>
    %211 = vector.multi_reduction <add>, %210, %cst_98 [1] : vector<8x256xf32> to vector<8xf32>
    %212 = vector.shape_cast %211 : vector<8xf32> to vector<8x1xf32>
    %cst_99 = arith.constant 2.560000e+02 : f32
    %213 = vector.broadcast %cst_99 : f32 to vector<8x1xf32>
    %214 = arith.divf %212, %213 : vector<8x1xf32>
    %cst_100 = arith.constant 9.99999974E-6 : f32
    %215 = vector.broadcast %cst_100 : f32 to vector<8x1xf32>
    %216 = arith.addf %214, %215 : vector<8x1xf32>
    %217 = math.rsqrt %216 : vector<8x1xf32>
    %218 = vector.broadcast %217 : vector<8x1xf32> to vector<8x256xf32>
    %219 = arith.mulf %209, %218 : vector<8x256xf32>
    %cst_101 = arith.constant 0.000000e+00 : f32
    %220 = vector.broadcast %cst_101 : f32 to vector<8x256xf32>
    %221 = arith.cmpf oge, %219, %220 : vector<8x256xf32>
    %222 = vector.broadcast %0 : f32 to vector<8x256xf32>
    %223 = arith.mulf %222, %219 : vector<8x256xf32>
    %224 = arith.select %221, %219, %223 : vector<8x256xi1>, vector<8x256xf32>
    %c34_i32_102 = arith.constant 34 : i32
    %225 = tpu.dynamic_rotate %224 by %c34_i32_102 dim 1 : vector<8x256xf32>, i32 -> vector<8x256xf32>
    %c0_103 = arith.constant 0 : index
    %c0_104 = arith.constant 0 : index
    %c0_105 = arith.constant 0 : index
    %226 = vector.load %arg2[%c0_103, %c0_104, %c0_105] : memref<25x1x256xf32, #tpu.memory_space<vmem>>, vector<1x1x256xf32>
    %227 = vector.shape_cast %226 : vector<1x1x256xf32> to vector<1x256xf32>
    %228 = vector.broadcast %227 : vector<1x256xf32> to vector<8x256xf32>
    %229 = arith.mulf %225, %228 : vector<8x256xf32>
    %230 = arith.truncf %229 : vector<8x256xf32> to vector<8x256xbf16>
    %c200 = arith.constant 200 : index
    %c0_106 = arith.constant 0 : index
    %231 = vector.load %arg11[%c200, %c0_106] : memref<400x256xbf16, #tpu.memory_space<vmem>>, vector<8x256xbf16>
    tpu.vector_store %arg11[%c200, %c0_106], %230 {strides = array<i32>} : memref<400x256xbf16, #tpu.memory_space<vmem>>, vector<8x256xbf16>,
    %c33_i32_107 = arith.constant 33 : i32
    %232 = tpu.dynamic_rotate %224 by %c33_i32_107 dim 1 : vector<8x256xf32>, i32 -> vector<8x256xf32>
    %c1_108 = arith.constant 1 : index
    %c0_109 = arith.constant 0 : index
    %c0_110 = arith.constant 0 : index
    %233 = vector.load %arg2[%c1_108, %c0_109, %c0_110] : memref<25x1x256xf32, #tpu.memory_space<vmem>>, vector<1x1x256xf32>
    %234 = vector.shape_cast %233 : vector<1x1x256xf32> to vector<1x256xf32>
    %235 = vector.broadcast %234 : vector<1x256xf32> to vector<8x256xf32>
    %236 = arith.mulf %232, %235 : vector<8x256xf32>
    %237 = arith.truncf %236 : vector<8x256xf32> to vector<8x256xbf16>
    %c208 = arith.constant 208 : index
    %c0_111 = arith.constant 0 : index
    %238 = vector.load %arg11[%c208, %c0_111] : memref<400x256xbf16, #tpu.memory_space<vmem>>, vector<8x256xbf16>
    tpu.vector_store %arg11[%c208, %c0_111], %237 {strides = array<i32>} : memref<400x256xbf16, #tpu.memory_space<vmem>>, vector<8x256xbf16>,
    %c32_i32_112 = arith.constant 32 : i32
    %239 = tpu.dynamic_rotate %224 by %c32_i32_112 dim 1 : vector<8x256xf32>, i32 -> vector<8x256xf32>
    %c2_113 = arith.constant 2 : index
    %c0_114 = arith.constant 0 : index
    %c0_115 = arith.constant 0 : index
    %240 = vector.load %arg2[%c2_113, %c0_114, %c0_115] : memref<25x1x256xf32, #tpu.memory_space<vmem>>, vector<1x1x256xf32>
    %241 = vector.shape_cast %240 : vector<1x1x256xf32> to vector<1x256xf32>
    %242 = vector.broadcast %241 : vector<1x256xf32> to vector<8x256xf32>
    %243 = arith.mulf %239, %242 : vector<8x256xf32>
    %244 = arith.truncf %243 : vector<8x256xf32> to vector<8x256xbf16>
    %c216 = arith.constant 216 : index
    %c0_116 = arith.constant 0 : index
    %245 = vector.load %arg11[%c216, %c0_116] : memref<400x256xbf16, #tpu.memory_space<vmem>>, vector<8x256xbf16>
    tpu.vector_store %arg11[%c216, %c0_116], %244 {strides = array<i32>} : memref<400x256xbf16, #tpu.memory_space<vmem>>, vector<8x256xbf16>,
    %c31_i32_117 = arith.constant 31 : i32
    %246 = tpu.dynamic_rotate %224 by %c31_i32_117 dim 1 : vector<8x256xf32>, i32 -> vector<8x256xf32>
    %c3_118 = arith.constant 3 : index
    %c0_119 = arith.constant 0 : index
    %c0_120 = arith.constant 0 : index
    %247 = vector.load %arg2[%c3_118, %c0_119, %c0_120] : memref<25x1x256xf32, #tpu.memory_space<vmem>>, vector<1x1x256xf32>
    %248 = vector.shape_cast %247 : vector<1x1x256xf32> to vector<1x256xf32>
    %249 = vector.broadcast %248 : vector<1x256xf32> to vector<8x256xf32>
    %250 = arith.mulf %246, %249 : vector<8x256xf32>
    %251 = arith.truncf %250 : vector<8x256xf32> to vector<8x256xbf16>
    %c224 = arith.constant 224 : index
    %c0_121 = arith.constant 0 : index
    %252 = vector.load %arg11[%c224, %c0_121] : memref<400x256xbf16, #tpu.memory_space<vmem>>, vector<8x256xbf16>
    tpu.vector_store %arg11[%c224, %c0_121], %251 {strides = array<i32>} : memref<400x256xbf16, #tpu.memory_space<vmem>>, vector<8x256xbf16>,
    %c30_i32_122 = arith.constant 30 : i32
    %253 = tpu.dynamic_rotate %224 by %c30_i32_122 dim 1 : vector<8x256xf32>, i32 -> vector<8x256xf32>
    %c4_123 = arith.constant 4 : index
    %c0_124 = arith.constant 0 : index
    %c0_125 = arith.constant 0 : index
    %254 = vector.load %arg2[%c4_123, %c0_124, %c0_125] : memref<25x1x256xf32, #tpu.memory_space<vmem>>, vector<1x1x256xf32>
    %255 = vector.shape_cast %254 : vector<1x1x256xf32> to vector<1x256xf32>
    %256 = vector.broadcast %255 : vector<1x256xf32> to vector<8x256xf32>
    %257 = arith.mulf %253, %256 : vector<8x256xf32>
    %258 = arith.truncf %257 : vector<8x256xf32> to vector<8x256xbf16>
    %c232 = arith.constant 232 : index
    %c0_126 = arith.constant 0 : index
    %259 = vector.load %arg11[%c232, %c0_126] : memref<400x256xbf16, #tpu.memory_space<vmem>>, vector<8x256xbf16>
    tpu.vector_store %arg11[%c232, %c0_126], %258 {strides = array<i32>} : memref<400x256xbf16, #tpu.memory_space<vmem>>, vector<8x256xbf16>,
    %c18_i32_127 = arith.constant 18 : i32
    %260 = tpu.dynamic_rotate %224 by %c18_i32_127 dim 1 : vector<8x256xf32>, i32 -> vector<8x256xf32>
    %c5_128 = arith.constant 5 : index
    %c0_129 = arith.constant 0 : index
    %c0_130 = arith.constant 0 : index
    %261 = vector.load %arg2[%c5_128, %c0_129, %c0_130] : memref<25x1x256xf32, #tpu.memory_space<vmem>>, vector<1x1x256xf32>
    %262 = vector.shape_cast %261 : vector<1x1x256xf32> to vector<1x256xf32>
    %263 = vector.broadcast %262 : vector<1x256xf32> to vector<8x256xf32>
    %264 = arith.mulf %260, %263 : vector<8x256xf32>
    %265 = arith.truncf %264 : vector<8x256xf32> to vector<8x256xbf16>
    %c240 = arith.constant 240 : index
    %c0_131 = arith.constant 0 : index
    %266 = vector.load %arg11[%c240, %c0_131] : memref<400x256xbf16, #tpu.memory_space<vmem>>, vector<8x256xbf16>
    tpu.vector_store %arg11[%c240, %c0_131], %265 {strides = array<i32>} : memref<400x256xbf16, #tpu.memory_space<vmem>>, vector<8x256xbf16>,
    %c17_i32_132 = arith.constant 17 : i32
    %267 = tpu.dynamic_rotate %224 by %c17_i32_132 dim 1 : vector<8x256xf32>, i32 -> vector<8x256xf32>
    %c6_133 = arith.constant 6 : index
    %c0_134 = arith.constant 0 : index
    %c0_135 = arith.constant 0 : index
    %268 = vector.load %arg2[%c6_133, %c0_134, %c0_135] : memref<25x1x256xf32, #tpu.memory_space<vmem>>, vector<1x1x256xf32>
    %269 = vector.shape_cast %268 : vector<1x1x256xf32> to vector<1x256xf32>
    %270 = vector.broadcast %269 : vector<1x256xf32> to vector<8x256xf32>
    %271 = arith.mulf %267, %270 : vector<8x256xf32>
    %272 = arith.truncf %271 : vector<8x256xf32> to vector<8x256xbf16>
    %c248 = arith.constant 248 : index
    %c0_136 = arith.constant 0 : index
    %273 = vector.load %arg11[%c248, %c0_136] : memref<400x256xbf16, #tpu.memory_space<vmem>>, vector<8x256xbf16>
    tpu.vector_store %arg11[%c248, %c0_136], %272 {strides = array<i32>} : memref<400x256xbf16, #tpu.memory_space<vmem>>, vector<8x256xbf16>,
    %c16_i32_137 = arith.constant 16 : i32
    %274 = tpu.dynamic_rotate %224 by %c16_i32_137 dim 1 : vector<8x256xf32>, i32 -> vector<8x256xf32>
    %c7_138 = arith.constant 7 : index
    %c0_139 = arith.constant 0 : index
    %c0_140 = arith.constant 0 : index
    %275 = vector.load %arg2[%c7_138, %c0_139, %c0_140] : memref<25x1x256xf32, #tpu.memory_space<vmem>>, vector<1x1x256xf32>
    %276 = vector.shape_cast %275 : vector<1x1x256xf32> to vector<1x256xf32>
    %277 = vector.broadcast %276 : vector<1x256xf32> to vector<8x256xf32>
    %278 = arith.mulf %274, %277 : vector<8x256xf32>
    %279 = arith.truncf %278 : vector<8x256xf32> to vector<8x256xbf16>
    %c256 = arith.constant 256 : index
    %c0_141 = arith.constant 0 : index
    %280 = vector.load %arg11[%c256, %c0_141] : memref<400x256xbf16, #tpu.memory_space<vmem>>, vector<8x256xbf16>
    tpu.vector_store %arg11[%c256, %c0_141], %279 {strides = array<i32>} : memref<400x256xbf16, #tpu.memory_space<vmem>>, vector<8x256xbf16>,
    %c15_i32_142 = arith.constant 15 : i32
    %281 = tpu.dynamic_rotate %224 by %c15_i32_142 dim 1 : vector<8x256xf32>, i32 -> vector<8x256xf32>
    %c8_143 = arith.constant 8 : index
    %c0_144 = arith.constant 0 : index
    %c0_145 = arith.constant 0 : index
    %282 = vector.load %arg2[%c8_143, %c0_144, %c0_145] : memref<25x1x256xf32, #tpu.memory_space<vmem>>, vector<1x1x256xf32>
    %283 = vector.shape_cast %282 : vector<1x1x256xf32> to vector<1x256xf32>
    %284 = vector.broadcast %283 : vector<1x256xf32> to vector<8x256xf32>
    %285 = arith.mulf %281, %284 : vector<8x256xf32>
    %286 = arith.truncf %285 : vector<8x256xf32> to vector<8x256xbf16>
    %c264 = arith.constant 264 : index
    %c0_146 = arith.constant 0 : index
    %287 = vector.load %arg11[%c264, %c0_146] : memref<400x256xbf16, #tpu.memory_space<vmem>>, vector<8x256xbf16>
    tpu.vector_store %arg11[%c264, %c0_146], %286 {strides = array<i32>} : memref<400x256xbf16, #tpu.memory_space<vmem>>, vector<8x256xbf16>,
    %c14_i32_147 = arith.constant 14 : i32
    %288 = tpu.dynamic_rotate %224 by %c14_i32_147 dim 1 : vector<8x256xf32>, i32 -> vector<8x256xf32>
    %c9_148 = arith.constant 9 : index
    %c0_149 = arith.constant 0 : index
    %c0_150 = arith.constant 0 : index
    %289 = vector.load %arg2[%c9_148, %c0_149, %c0_150] : memref<25x1x256xf32, #tpu.memory_space<vmem>>, vector<1x1x256xf32>
    %290 = vector.shape_cast %289 : vector<1x1x256xf32> to vector<1x256xf32>
    %291 = vector.broadcast %290 : vector<1x256xf32> to vector<8x256xf32>
    %292 = arith.mulf %288, %291 : vector<8x256xf32>
    %293 = arith.truncf %292 : vector<8x256xf32> to vector<8x256xbf16>
    %c272 = arith.constant 272 : index
    %c0_151 = arith.constant 0 : index
    %294 = vector.load %arg11[%c272, %c0_151] : memref<400x256xbf16, #tpu.memory_space<vmem>>, vector<8x256xbf16>
    tpu.vector_store %arg11[%c272, %c0_151], %293 {strides = array<i32>} : memref<400x256xbf16, #tpu.memory_space<vmem>>, vector<8x256xbf16>,
    %c2_i32_152 = arith.constant 2 : i32
    %295 = tpu.dynamic_rotate %224 by %c2_i32_152 dim 1 : vector<8x256xf32>, i32 -> vector<8x256xf32>
    %c10_153 = arith.constant 10 : index
    %c0_154 = arith.constant 0 : index
    %c0_155 = arith.constant 0 : index
    %296 = vector.load %arg2[%c10_153, %c0_154, %c0_155] : memref<25x1x256xf32, #tpu.memory_space<vmem>>, vector<1x1x256xf32>
    %297 = vector.shape_cast %296 : vector<1x1x256xf32> to vector<1x256xf32>
    %298 = vector.broadcast %297 : vector<1x256xf32> to vector<8x256xf32>
    %299 = arith.mulf %295, %298 : vector<8x256xf32>
    %300 = arith.truncf %299 : vector<8x256xf32> to vector<8x256xbf16>
    %c280 = arith.constant 280 : index
    %c0_156 = arith.constant 0 : index
    %301 = vector.load %arg11[%c280, %c0_156] : memref<400x256xbf16, #tpu.memory_space<vmem>>, vector<8x256xbf16>
    tpu.vector_store %arg11[%c280, %c0_156], %300 {strides = array<i32>} : memref<400x256xbf16, #tpu.memory_space<vmem>>, vector<8x256xbf16>,
    %c1_i32_157 = arith.constant 1 : i32
    %302 = tpu.dynamic_rotate %224 by %c1_i32_157 dim 1 : vector<8x256xf32>, i32 -> vector<8x256xf32>
    %c11_158 = arith.constant 11 : index
    %c0_159 = arith.constant 0 : index
    %c0_160 = arith.constant 0 : index
    %303 = vector.load %arg2[%c11_158, %c0_159, %c0_160] : memref<25x1x256xf32, #tpu.memory_space<vmem>>, vector<1x1x256xf32>
    %304 = vector.shape_cast %303 : vector<1x1x256xf32> to vector<1x256xf32>
    %305 = vector.broadcast %304 : vector<1x256xf32> to vector<8x256xf32>
    %306 = arith.mulf %302, %305 : vector<8x256xf32>
    %307 = arith.truncf %306 : vector<8x256xf32> to vector<8x256xbf16>
    %c288 = arith.constant 288 : index
    %c0_161 = arith.constant 0 : index
    %308 = vector.load %arg11[%c288, %c0_161] : memref<400x256xbf16, #tpu.memory_space<vmem>>, vector<8x256xbf16>
    tpu.vector_store %arg11[%c288, %c0_161], %307 {strides = array<i32>} : memref<400x256xbf16, #tpu.memory_space<vmem>>, vector<8x256xbf16>,
    %c12_162 = arith.constant 12 : index
    %c0_163 = arith.constant 0 : index
    %c0_164 = arith.constant 0 : index
    %309 = vector.load %arg2[%c12_162, %c0_163, %c0_164] : memref<25x1x256xf32, #tpu.memory_space<vmem>>, vector<1x1x256xf32>
    %310 = vector.shape_cast %309 : vector<1x1x256xf32> to vector<1x256xf32>
    %311 = vector.broadcast %310 : vector<1x256xf32> to vector<8x256xf32>
    %312 = arith.mulf %224, %311 : vector<8x256xf32>
    %313 = arith.truncf %312 : vector<8x256xf32> to vector<8x256xbf16>
    %c296 = arith.constant 296 : index
    %c0_165 = arith.constant 0 : index
    %314 = vector.load %arg11[%c296, %c0_165] : memref<400x256xbf16, #tpu.memory_space<vmem>>, vector<8x256xbf16>
    tpu.vector_store %arg11[%c296, %c0_165], %313 {strides = array<i32>} : memref<400x256xbf16, #tpu.memory_space<vmem>>, vector<8x256xbf16>,
    %c255_i32_166 = arith.constant 255 : i32
    %315 = tpu.dynamic_rotate %224 by %c255_i32_166 dim 1 : vector<8x256xf32>, i32 -> vector<8x256xf32>
    %c13_167 = arith.constant 13 : index
    %c0_168 = arith.constant 0 : index
    %c0_169 = arith.constant 0 : index
    %316 = vector.load %arg2[%c13_167, %c0_168, %c0_169] : memref<25x1x256xf32, #tpu.memory_space<vmem>>, vector<1x1x256xf32>
    %317 = vector.shape_cast %316 : vector<1x1x256xf32> to vector<1x256xf32>
    %318 = vector.broadcast %317 : vector<1x256xf32> to vector<8x256xf32>
    %319 = arith.mulf %315, %318 : vector<8x256xf32>
    %320 = arith.truncf %319 : vector<8x256xf32> to vector<8x256xbf16>
    %c304 = arith.constant 304 : index
    %c0_170 = arith.constant 0 : index
    %321 = vector.load %arg11[%c304, %c0_170] : memref<400x256xbf16, #tpu.memory_space<vmem>>, vector<8x256xbf16>
    tpu.vector_store %arg11[%c304, %c0_170], %320 {strides = array<i32>} : memref<400x256xbf16, #tpu.memory_space<vmem>>, vector<8x256xbf16>,
    %c254_i32_171 = arith.constant 254 : i32
    %322 = tpu.dynamic_rotate %224 by %c254_i32_171 dim 1 : vector<8x256xf32>, i32 -> vector<8x256xf32>
    %c14_172 = arith.constant 14 : index
    %c0_173 = arith.constant 0 : index
    %c0_174 = arith.constant 0 : index
    %323 = vector.load %arg2[%c14_172, %c0_173, %c0_174] : memref<25x1x256xf32, #tpu.memory_space<vmem>>, vector<1x1x256xf32>
    %324 = vector.shape_cast %323 : vector<1x1x256xf32> to vector<1x256xf32>
    %325 = vector.broadcast %324 : vector<1x256xf32> to vector<8x256xf32>
    %326 = arith.mulf %322, %325 : vector<8x256xf32>
    %327 = arith.truncf %326 : vector<8x256xf32> to vector<8x256xbf16>
    %c312 = arith.constant 312 : index
    %c0_175 = arith.constant 0 : index
    %328 = vector.load %arg11[%c312, %c0_175] : memref<400x256xbf16, #tpu.memory_space<vmem>>, vector<8x256xbf16>
    tpu.vector_store %arg11[%c312, %c0_175], %327 {strides = array<i32>} : memref<400x256xbf16, #tpu.memory_space<vmem>>, vector<8x256xbf16>,
    %c242_i32_176 = arith.constant 242 : i32
    %329 = tpu.dynamic_rotate %224 by %c242_i32_176 dim 1 : vector<8x256xf32>, i32 -> vector<8x256xf32>
    %c15_177 = arith.constant 15 : index
    %c0_178 = arith.constant 0 : index
    %c0_179 = arith.constant 0 : index
    %330 = vector.load %arg2[%c15_177, %c0_178, %c0_179] : memref<25x1x256xf32, #tpu.memory_space<vmem>>, vector<1x1x256xf32>
    %331 = vector.shape_cast %330 : vector<1x1x256xf32> to vector<1x256xf32>
    %332 = vector.broadcast %331 : vector<1x256xf32> to vector<8x256xf32>
    %333 = arith.mulf %329, %332 : vector<8x256xf32>
    %334 = arith.truncf %333 : vector<8x256xf32> to vector<8x256xbf16>
    %c320 = arith.constant 320 : index
    %c0_180 = arith.constant 0 : index
    %335 = vector.load %arg11[%c320, %c0_180] : memref<400x256xbf16, #tpu.memory_space<vmem>>, vector<8x256xbf16>
    tpu.vector_store %arg11[%c320, %c0_180], %334 {strides = array<i32>} : memref<400x256xbf16, #tpu.memory_space<vmem>>, vector<8x256xbf16>,
    %c241_i32_181 = arith.constant 241 : i32
    %336 = tpu.dynamic_rotate %224 by %c241_i32_181 dim 1 : vector<8x256xf32>, i32 -> vector<8x256xf32>
    %c16_182 = arith.constant 16 : index
    %c0_183 = arith.constant 0 : index
    %c0_184 = arith.constant 0 : index
    %337 = vector.load %arg2[%c16_182, %c0_183, %c0_184] : memref<25x1x256xf32, #tpu.memory_space<vmem>>, vector<1x1x256xf32>
    %338 = vector.shape_cast %337 : vector<1x1x256xf32> to vector<1x256xf32>
    %339 = vector.broadcast %338 : vector<1x256xf32> to vector<8x256xf32>
    %340 = arith.mulf %336, %339 : vector<8x256xf32>
    %341 = arith.truncf %340 : vector<8x256xf32> to vector<8x256xbf16>
    %c328 = arith.constant 328 : index
    %c0_185 = arith.constant 0 : index
    %342 = vector.load %arg11[%c328, %c0_185] : memref<400x256xbf16, #tpu.memory_space<vmem>>, vector<8x256xbf16>
    tpu.vector_store %arg11[%c328, %c0_185], %341 {strides = array<i32>} : memref<400x256xbf16, #tpu.memory_space<vmem>>, vector<8x256xbf16>,
    %c240_i32_186 = arith.constant 240 : i32
    %343 = tpu.dynamic_rotate %224 by %c240_i32_186 dim 1 : vector<8x256xf32>, i32 -> vector<8x256xf32>
    %c17_187 = arith.constant 17 : index
    %c0_188 = arith.constant 0 : index
    %c0_189 = arith.constant 0 : index
    %344 = vector.load %arg2[%c17_187, %c0_188, %c0_189] : memref<25x1x256xf32, #tpu.memory_space<vmem>>, vector<1x1x256xf32>
    %345 = vector.shape_cast %344 : vector<1x1x256xf32> to vector<1x256xf32>
    %346 = vector.broadcast %345 : vector<1x256xf32> to vector<8x256xf32>
    %347 = arith.mulf %343, %346 : vector<8x256xf32>
    %348 = arith.truncf %347 : vector<8x256xf32> to vector<8x256xbf16>
    %c336 = arith.constant 336 : index
    %c0_190 = arith.constant 0 : index
    %349 = vector.load %arg11[%c336, %c0_190] : memref<400x256xbf16, #tpu.memory_space<vmem>>, vector<8x256xbf16>
    tpu.vector_store %arg11[%c336, %c0_190], %348 {strides = array<i32>} : memref<400x256xbf16, #tpu.memory_space<vmem>>, vector<8x256xbf16>,
    %c239_i32_191 = arith.constant 239 : i32
    %350 = tpu.dynamic_rotate %224 by %c239_i32_191 dim 1 : vector<8x256xf32>, i32 -> vector<8x256xf32>
    %c18_192 = arith.constant 18 : index
    %c0_193 = arith.constant 0 : index
    %c0_194 = arith.constant 0 : index
    %351 = vector.load %arg2[%c18_192, %c0_193, %c0_194] : memref<25x1x256xf32, #tpu.memory_space<vmem>>, vector<1x1x256xf32>
    %352 = vector.shape_cast %351 : vector<1x1x256xf32> to vector<1x256xf32>
    %353 = vector.broadcast %352 : vector<1x256xf32> to vector<8x256xf32>
    %354 = arith.mulf %350, %353 : vector<8x256xf32>
    %355 = arith.truncf %354 : vector<8x256xf32> to vector<8x256xbf16>
    %c344 = arith.constant 344 : index
    %c0_195 = arith.constant 0 : index
    %356 = vector.load %arg11[%c344, %c0_195] : memref<400x256xbf16, #tpu.memory_space<vmem>>, vector<8x256xbf16>
    tpu.vector_store %arg11[%c344, %c0_195], %355 {strides = array<i32>} : memref<400x256xbf16, #tpu.memory_space<vmem>>, vector<8x256xbf16>,
    %c238_i32_196 = arith.constant 238 : i32
    %357 = tpu.dynamic_rotate %224 by %c238_i32_196 dim 1 : vector<8x256xf32>, i32 -> vector<8x256xf32>
    %c19_197 = arith.constant 19 : index
    %c0_198 = arith.constant 0 : index
    %c0_199 = arith.constant 0 : index
    %358 = vector.load %arg2[%c19_197, %c0_198, %c0_199] : memref<25x1x256xf32, #tpu.memory_space<vmem>>, vector<1x1x256xf32>
    %359 = vector.shape_cast %358 : vector<1x1x256xf32> to vector<1x256xf32>
    %360 = vector.broadcast %359 : vector<1x256xf32> to vector<8x256xf32>
    %361 = arith.mulf %357, %360 : vector<8x256xf32>
    %362 = arith.truncf %361 : vector<8x256xf32> to vector<8x256xbf16>
    %c352 = arith.constant 352 : index
    %c0_200 = arith.constant 0 : index
    %363 = vector.load %arg11[%c352, %c0_200] : memref<400x256xbf16, #tpu.memory_space<vmem>>, vector<8x256xbf16>
    tpu.vector_store %arg11[%c352, %c0_200], %362 {strides = array<i32>} : memref<400x256xbf16, #tpu.memory_space<vmem>>, vector<8x256xbf16>,
    %c226_i32_201 = arith.constant 226 : i32
    %364 = tpu.dynamic_rotate %224 by %c226_i32_201 dim 1 : vector<8x256xf32>, i32 -> vector<8x256xf32>
    %c20_202 = arith.constant 20 : index
    %c0_203 = arith.constant 0 : index
    %c0_204 = arith.constant 0 : index
    %365 = vector.load %arg2[%c20_202, %c0_203, %c0_204] : memref<25x1x256xf32, #tpu.memory_space<vmem>>, vector<1x1x256xf32>
    %366 = vector.shape_cast %365 : vector<1x1x256xf32> to vector<1x256xf32>
    %367 = vector.broadcast %366 : vector<1x256xf32> to vector<8x256xf32>
    %368 = arith.mulf %364, %367 : vector<8x256xf32>
    %369 = arith.truncf %368 : vector<8x256xf32> to vector<8x256xbf16>
    %c360 = arith.constant 360 : index
    %c0_205 = arith.constant 0 : index
    %370 = vector.load %arg11[%c360, %c0_205] : memref<400x256xbf16, #tpu.memory_space<vmem>>, vector<8x256xbf16>
    tpu.vector_store %arg11[%c360, %c0_205], %369 {strides = array<i32>} : memref<400x256xbf16, #tpu.memory_space<vmem>>, vector<8x256xbf16>,
    %c225_i32_206 = arith.constant 225 : i32
    %371 = tpu.dynamic_rotate %224 by %c225_i32_206 dim 1 : vector<8x256xf32>, i32 -> vector<8x256xf32>
    %c21_207 = arith.constant 21 : index
    %c0_208 = arith.constant 0 : index
    %c0_209 = arith.constant 0 : index
    %372 = vector.load %arg2[%c21_207, %c0_208, %c0_209] : memref<25x1x256xf32, #tpu.memory_space<vmem>>, vector<1x1x256xf32>
    %373 = vector.shape_cast %372 : vector<1x1x256xf32> to vector<1x256xf32>
    %374 = vector.broadcast %373 : vector<1x256xf32> to vector<8x256xf32>
    %375 = arith.mulf %371, %374 : vector<8x256xf32>
    %376 = arith.truncf %375 : vector<8x256xf32> to vector<8x256xbf16>
    %c368 = arith.constant 368 : index
    %c0_210 = arith.constant 0 : index
    %377 = vector.load %arg11[%c368, %c0_210] : memref<400x256xbf16, #tpu.memory_space<vmem>>, vector<8x256xbf16>
    tpu.vector_store %arg11[%c368, %c0_210], %376 {strides = array<i32>} : memref<400x256xbf16, #tpu.memory_space<vmem>>, vector<8x256xbf16>,
    %c224_i32_211 = arith.constant 224 : i32
    %378 = tpu.dynamic_rotate %224 by %c224_i32_211 dim 1 : vector<8x256xf32>, i32 -> vector<8x256xf32>
    %c22_212 = arith.constant 22 : index
    %c0_213 = arith.constant 0 : index
    %c0_214 = arith.constant 0 : index
    %379 = vector.load %arg2[%c22_212, %c0_213, %c0_214] : memref<25x1x256xf32, #tpu.memory_space<vmem>>, vector<1x1x256xf32>
    %380 = vector.shape_cast %379 : vector<1x1x256xf32> to vector<1x256xf32>
    %381 = vector.broadcast %380 : vector<1x256xf32> to vector<8x256xf32>
    %382 = arith.mulf %378, %381 : vector<8x256xf32>
    %383 = arith.truncf %382 : vector<8x256xf32> to vector<8x256xbf16>
    %c376 = arith.constant 376 : index
    %c0_215 = arith.constant 0 : index
    %384 = vector.load %arg11[%c376, %c0_215] : memref<400x256xbf16, #tpu.memory_space<vmem>>, vector<8x256xbf16>
    tpu.vector_store %arg11[%c376, %c0_215], %383 {strides = array<i32>} : memref<400x256xbf16, #tpu.memory_space<vmem>>, vector<8x256xbf16>,
    %c223_i32_216 = arith.constant 223 : i32
    %385 = tpu.dynamic_rotate %224 by %c223_i32_216 dim 1 : vector<8x256xf32>, i32 -> vector<8x256xf32>
    %c23_217 = arith.constant 23 : index
    %c0_218 = arith.constant 0 : index
    %c0_219 = arith.constant 0 : index
    %386 = vector.load %arg2[%c23_217, %c0_218, %c0_219] : memref<25x1x256xf32, #tpu.memory_space<vmem>>, vector<1x1x256xf32>
    %387 = vector.shape_cast %386 : vector<1x1x256xf32> to vector<1x256xf32>
    %388 = vector.broadcast %387 : vector<1x256xf32> to vector<8x256xf32>
    %389 = arith.mulf %385, %388 : vector<8x256xf32>
    %390 = arith.truncf %389 : vector<8x256xf32> to vector<8x256xbf16>
    %c384 = arith.constant 384 : index
    %c0_220 = arith.constant 0 : index
    %391 = vector.load %arg11[%c384, %c0_220] : memref<400x256xbf16, #tpu.memory_space<vmem>>, vector<8x256xbf16>
    tpu.vector_store %arg11[%c384, %c0_220], %390 {strides = array<i32>} : memref<400x256xbf16, #tpu.memory_space<vmem>>, vector<8x256xbf16>,
    %c222_i32_221 = arith.constant 222 : i32
    %392 = tpu.dynamic_rotate %224 by %c222_i32_221 dim 1 : vector<8x256xf32>, i32 -> vector<8x256xf32>
    %c24_222 = arith.constant 24 : index
    %c0_223 = arith.constant 0 : index
    %c0_224 = arith.constant 0 : index
    %393 = vector.load %arg2[%c24_222, %c0_223, %c0_224] : memref<25x1x256xf32, #tpu.memory_space<vmem>>, vector<1x1x256xf32>
    %394 = vector.shape_cast %393 : vector<1x1x256xf32> to vector<1x256xf32>
    %395 = vector.broadcast %394 : vector<1x256xf32> to vector<8x256xf32>
    %396 = arith.mulf %392, %395 : vector<8x256xf32>
    %397 = arith.truncf %396 : vector<8x256xf32> to vector<8x256xbf16>
    %c392 = arith.constant 392 : index
    %c0_225 = arith.constant 0 : index
    %398 = vector.load %arg11[%c392, %c0_225] : memref<400x256xbf16, #tpu.memory_space<vmem>>, vector<8x256xbf16>
    tpu.vector_store %arg11[%c392, %c0_225], %397 {strides = array<i32>} : memref<400x256xbf16, #tpu.memory_space<vmem>>, vector<8x256xbf16>,
    %c0_226 = arith.constant 0 : index
    %c0_227 = arith.constant 0 : index
    %399 = vector.load %arg5[%c0_226, %c0_227] : memref<8x400xbf16, #tpu.memory_space<vmem>>, vector<8x400xbf16>
    %c0_228 = arith.constant 0 : index
    %c0_229 = arith.constant 0 : index
    %400 = vector.load %arg11[%c0_228, %c0_229] : memref<400x256xbf16, #tpu.memory_space<vmem>>, vector<400x256xbf16>
    %cst_230 = arith.constant dense<0.000000e+00> : vector<8x256xf32>
    %401 = tpu.matmul %399, %400, %cst_230 {dimension_numbers = #tpu.dot_dimension_numbers<[1], [0], [0], [1], [0, 0, 1, 1], [], []>} : vector<8x400xbf16>, vector<400x256xbf16>, vector<8x256xf32> -> vector<8x256xf32>
    %c0_231 = arith.constant 0 : index
    %c0_232 = arith.constant 0 : index
    %402 = vector.load %arg8[%c0_231, %c0_232] : memref<8x1xf32, #tpu.memory_space<vmem>>, vector<8x1xf32>
    %403 = vector.broadcast %402 : vector<8x1xf32> to vector<8x256xf32>
    %404 = arith.addf %401, %403 : vector<8x256xf32>
    %cst_233 = arith.constant dense<0.000000e+00> : vector<8xf32>
    %405 = vector.multi_reduction <add>, %404, %cst_233 [1] : vector<8x256xf32> to vector<8xf32>
    %406 = vector.shape_cast %405 : vector<8xf32> to vector<8x1xf32>
    %cst_234 = arith.constant 2.560000e+02 : f32
    %407 = vector.broadcast %cst_234 : f32 to vector<8x1xf32>
    %408 = arith.divf %406, %407 : vector<8x1xf32>
    %409 = vector.broadcast %408 : vector<8x1xf32> to vector<8x256xf32>
    %410 = arith.subf %404, %409 : vector<8x256xf32>
    %411 = arith.mulf %410, %410 : vector<8x256xf32>
    %cst_235 = arith.constant dense<0.000000e+00> : vector<8xf32>
    %412 = vector.multi_reduction <add>, %411, %cst_235 [1] : vector<8x256xf32> to vector<8xf32>
    %413 = vector.shape_cast %412 : vector<8xf32> to vector<8x1xf32>
    %cst_236 = arith.constant 2.560000e+02 : f32
    %414 = vector.broadcast %cst_236 : f32 to vector<8x1xf32>
    %415 = arith.divf %413, %414 : vector<8x1xf32>
    %cst_237 = arith.constant 9.99999974E-6 : f32
    %416 = vector.broadcast %cst_237 : f32 to vector<8x1xf32>
    %417 = arith.addf %415, %416 : vector<8x1xf32>
    %418 = math.rsqrt %417 : vector<8x1xf32>
    %419 = vector.broadcast %418 : vector<8x1xf32> to vector<8x256xf32>
    %420 = arith.mulf %410, %419 : vector<8x256xf32>
    %cst_238 = arith.constant 0.000000e+00 : f32
    %421 = vector.broadcast %cst_238 : f32 to vector<8x256xf32>
    %422 = arith.cmpf oge, %420, %421 : vector<8x256xf32>
    %423 = vector.broadcast %0 : f32 to vector<8x256xf32>
    %424 = arith.mulf %423, %420 : vector<8x256xf32>
    %425 = arith.select %422, %420, %424 : vector<8x256xi1>, vector<8x256xf32>
    %426 = tpu.concatenate %23, %224, %425 in 0 : vector<8x256xf32>, vector<8x256xf32>, vector<8x256xf32> -> vector<24x256xf32>
    %c0_239 = arith.constant 0 : index
    %c0_240 = arith.constant 0 : index
    %427 = vector.load %arg6[%c0_239, %c0_240] : memref<8x24xbf16, #tpu.memory_space<vmem>>, vector<8x24xbf16>
    %428 = arith.truncf %426 : vector<24x256xf32> to vector<24x256xbf16>
    %cst_241 = arith.constant dense<0.000000e+00> : vector<8x256xf32>
    %429 = tpu.matmul %427, %428, %cst_241 {dimension_numbers = #tpu.dot_dimension_numbers<[1], [0], [0], [1], [0, 0, 1, 1], [], []>} : vector<8x24xbf16>, vector<24x256xbf16>, vector<8x256xf32> -> vector<8x256xf32>
    %c0_242 = arith.constant 0 : index
    %c0_243 = arith.constant 0 : index
    %430 = vector.load %arg9[%c0_242, %c0_243] : memref<8x1xf32, #tpu.memory_space<vmem>>, vector<8x1xf32>
    %431 = vector.broadcast %430 : vector<8x1xf32> to vector<8x256xf32>
    %432 = arith.addf %429, %431 : vector<8x256xf32>
    %c0_244 = arith.constant 0 : index
    %c0_245 = arith.constant 0 : index
    %c0_246 = arith.constant 0 : index
    %433 = vector.load %arg10[%c0_244, %c0_245, %c0_246] : memref<1x8x256xf32, #tpu.memory_space<vmem>>, vector<1x8x256xf32>
    %434 = vector.shape_cast %433 : vector<1x8x256xf32> to vector<8x256xf32>
    %435 = vector.shape_cast %432 : vector<8x256xf32> to vector<1x8x256xf32>
    tpu.vector_store %arg10[%c0_244, %c0_245, %c0_246], %435 {strides = array<i32>} : memref<1x8x256xf32, #tpu.memory_space<vmem>>, vector<1x8x256xf32>,
    return
  }
  func.func @transform_0(%arg0: i32) -> (i32, i32) {
    %c0_i32 = arith.constant 0 : i32
    %c0_i32_0 = arith.constant 0 : i32
    %c0_i32_1 = arith.constant 0 : i32
    return %c0_i32, %c0_i32_0 : i32, i32
  }
  func.func @transform_1(%arg0: i32) -> (i32, i32, i32) {
    %c0_i32 = arith.constant 0 : i32
    %c0_i32_0 = arith.constant 0 : i32
    %c0_i32_1 = arith.constant 0 : i32
    %c0_i32_2 = arith.constant 0 : i32
    return %c0_i32, %c0_i32_0, %c0_i32_1 : i32, i32, i32
  }
  func.func @transform_2(%arg0: i32) -> (i32, i32, i32) {
    %c0_i32 = arith.constant 0 : i32
    %c0_i32_0 = arith.constant 0 : i32
    %c0_i32_1 = arith.constant 0 : i32
    return %arg0, %c0_i32, %c0_i32_0 : i32, i32, i32
  }
  func.func @transform_3(%arg0: i32) -> (i32, i32) {
    %c0_i32 = arith.constant 0 : i32
    %c0_i32_0 = arith.constant 0 : i32
    %c0_i32_1 = arith.constant 0 : i32
    return %c0_i32, %c0_i32_0 : i32, i32
  }
  func.func @transform_4(%arg0: i32) -> (i32, i32) {
    %c0_i32 = arith.constant 0 : i32
    %c0_i32_0 = arith.constant 0 : i32
    %c0_i32_1 = arith.constant 0 : i32
    return %c0_i32, %c0_i32_0 : i32, i32
  }
  func.func @transform_5(%arg0: i32) -> (i32, i32) {
    %c0_i32 = arith.constant 0 : i32
    %c0_i32_0 = arith.constant 0 : i32
    %c0_i32_1 = arith.constant 0 : i32
    return %c0_i32, %c0_i32_0 : i32, i32
  }
  func.func @transform_6(%arg0: i32) -> (i32, i32) {
    %c0_i32 = arith.constant 0 : i32
    %c0_i32_0 = arith.constant 0 : i32
    %c0_i32_1 = arith.constant 0 : i32
    return %c0_i32, %c0_i32_0 : i32, i32
  }
  func.func @transform_7(%arg0: i32) -> (i32, i32) {
    %c0_i32 = arith.constant 0 : i32
    %c0_i32_0 = arith.constant 0 : i32
    %c0_i32_1 = arith.constant 0 : i32
    return %c0_i32, %c0_i32_0 : i32, i32
  }
  func.func @transform_8(%arg0: i32) -> (i32, i32) {
    %c0_i32 = arith.constant 0 : i32
    %c0_i32_0 = arith.constant 0 : i32
    %c0_i32_1 = arith.constant 0 : i32
    return %c0_i32, %c0_i32_0 : i32, i32
  }
  func.func @transform_9(%arg0: i32) -> (i32, i32, i32) {
    %c0_i32 = arith.constant 0 : i32
    %c0_i32_0 = arith.constant 0 : i32
    %c0_i32_1 = arith.constant 0 : i32
    return %arg0, %c0_i32, %c0_i32_0 : i32, i32, i32
  }
}

</mosaic_0001>

<llo_original>
// kernel: dense_block_forward.1
$region0: #{dense_block_forward.1}
  #allocation0 [shape = 'u32[]', space=smem, size = 0x4, offset = 0x4, fixed_abs, tag = 'smem constant byte address 0x4 - core index']
  #allocation1 [shape = 'u32[72,128]{1,0:T(1,128)}', space=vmem, size = 0x9000, scoped, tag = 'internal scratch']
  #allocation2 [shape = 'bf16[400,256]{1,0:T(8,128)(2,1)}', space=vmem, size = 0x32000, scoped, tag = 'scratch operand']
  #allocation3 [shape = 'f32[1,1]{1,0:T(1,128)S(6)}', space=smem, size = 0x200, scoped, tag = 'scoped memory for dense_block_forward.1']
  %s0 = inlined_call_operand.<no memory space> [shape: f32[1,1], index: 0, kind: input, shape index: {}]
  %s1 = inlined_call_operand.vmem [shape: f32[25,1,256], index: 1, kind: input, shape index: {}]
  %s2 = inlined_call_operand.vmem [shape: f32[2,8,256], index: 2, kind: input, shape index: {}]
  %s3 = inlined_call_operand.vmem [shape: bf16[8,200], index: 3, kind: input, shape index: {}]
  %s4 = inlined_call_operand.vmem [shape: bf16[8,400], index: 4, kind: input, shape index: {}]
  %s5 = inlined_call_operand.vmem [shape: bf16[8,24], index: 5, kind: input, shape index: {}]
  %s6 = inlined_call_operand.vmem [shape: f32[8,1], index: 6, kind: input, shape index: {}]
  %s7 = inlined_call_operand.vmem [shape: f32[8,1], index: 7, kind: input, shape index: {}]
  %s8 = inlined_call_operand.vmem [shape: f32[8,1], index: 8, kind: input, shape index: {}]
  %s9 = inlined_call_operand.vmem [shape: f32[2,8,256], index: 9, kind: output, shape index: {}]
  %s10 = sld [smem:[#allocation0]]
  $region69: #{dense_block_forward.1} parent=0
    _
  %s12 = ssub.s32 1, %s10
  %s13 = scalar_select 0, %s12, %s10
  %14 = sst [smem:[#allocation3]] %s0
  loop: start=0, step=1, limit=4
  $region2: #{dense_block_forward.1} parent=0 // loop_pre_header
    _
  $region3: #{dense_block_forward.1} parent=0 // loop_header
    %s16 = sphi 0, %s20
    %p17 = scmp.ge.s32.totalorder %s16, 4
    %s24 = sphi 0, %s24
    %s26 = sphi 0, %s24
    %s27 = sphi 0, %s26
    %s41 = sphi 0, %s27
    %s45 = sphi 0, %s45
    %s47 = sphi 0, %s45
    %s48 = sphi 0, %s47
    %s62 = sphi 0, %s48
    %s68 = sphi 0, %s70
    %s71 = sphi 0, %s68
    %s72 = sphi 0, %s71
    %s88 = sphi 0, %s72
    %s92 = sphi 0, %s92
    %s94 = sphi 0, %s92
    %s95 = sphi 0, %s94
    %s109 = sphi 0, %s95
    %s113 = sphi 0, %s113
    %s115 = sphi 0, %s113
    %s116 = sphi 0, %s115
    %s130 = sphi 0, %s116
    %s134 = sphi 0, %s134
    %s136 = sphi 0, %s134
    %s137 = sphi 0, %s136
    %s151 = sphi 0, %s137
    %s155 = sphi 0, %s155
    %s157 = sphi 0, %s155
    %s158 = sphi 0, %s157
    %s172 = sphi 0, %s158
    %s176 = sphi 0, %s176
    %s178 = sphi 0, %s176
    %s179 = sphi 0, %s178
    %s193 = sphi 0, %s179
    %s197 = sphi 0, %s197
    %s199 = sphi 0, %s197
    %s200 = sphi 0, %s199
    %s214 = sphi 0, %s200
    %s220 = sphi 0, %s222
    %s223 = sphi 0, %s220
    %s224 = sphi 0, %s223
    %s240 = sphi 0, %s224
  $region4: #{dense_block_forward.1} parent=0 // loop_header_branch
    %19 = sbr.rel (%p17) target = $region8
  $region5: #{dense_block_forward.1} parent=0 // loop_body
    %s21 = ssub.s32 %s16, 1
    %s22 = ssub.s32 %s16, 2
    %s23 = sadd.s32 %s16, 1
    %s25 = sadd.s32 %s24, 1
    %p28 = scmp.eq.s32.totalorder %s16, 1
    %p29 = scmp.ne.s32.totalorder %s24, %s26
    %p30 = scmp.eq.s32.totalorder %s16, 0
    %p31 = por %p29, %p30
    %p32 = scmp.ne.s32.totalorder %s24, %s26
    %p33 = scmp.eq.s32.totalorder %s21, 1
    %p34 = por %p32, %p33
    %p35 = scmp.ne.s32.totalorder %s26, %s27
    %p36 = scmp.eq.s32.totalorder %s21, 0
    %p37 = por %p35, %p36
    %p38 = scmp.ne.s32.totalorder %s26, %s27
    %p39 = scmp.eq.s32.totalorder %s22, 1
    %p40 = por %p38, %p39
    %p42 = scmp.ne.s32.totalorder %s27, %s41
    %p43 = scmp.eq.s32.totalorder %s22, 0
    %p44 = por %p42, %p43
    %s46 = sadd.s32 %s45, 1
    %p49 = scmp.eq.s32.totalorder %s16, 1
    %p50 = scmp.ne.s32.totalorder %s45, %s47
    %p51 = scmp.eq.s32.totalorder %s16, 0
    %p52 = por %p50, %p51
    %p53 = scmp.ne.s32.totalorder %s45, %s47
    %p54 = scmp.eq.s32.totalorder %s21, 1
    %p55 = por %p53, %p54
    %p56 = scmp.ne.s32.totalorder %s47, %s48
    %p57 = scmp.eq.s32.totalorder %s21, 0
    %p58 = por %p56, %p57
    %p59 = scmp.ne.s32.totalorder %s47, %s48
    %p60 = scmp.eq.s32.totalorder %s22, 1
    %p61 = por %p59, %p60
    %p63 = scmp.ne.s32.totalorder %s48, %s62
    %p64 = scmp.eq.s32.totalorder %s22, 0
    %p65 = por %p63, %p64
    %s66 = ssub.s32 %s16, %s23
    %p67 = scmp.eq.s32.totalorder %s66, 0
    %s69 = sadd.s32 %s68, 1
    %s70 = scalar_select %p67, %s68, %s69
    %p73 = pneg %p67
    %p74 = scmp.eq.s32.totalorder %s16, 1
    %p75 = por %p73, %p74
    %p76 = scmp.ne.s32.totalorder %s68, %s71
    %p77 = scmp.eq.s32.totalorder %s16, 0
    %p78 = por %p76, %p77
    %p79 = scmp.ne.s32.totalorder %s68, %s71
    %p80 = scmp.eq.s32.totalorder %s21, 1
    %p81 = por %p79, %p80
    %p82 = scmp.ne.s32.totalorder %s71, %s72
    %p83 = scmp.eq.s32.totalorder %s21, 0
    %p84 = por %p82, %p83
    %p85 = scmp.ne.s32.totalorder %s71, %s72
    %p86 = scmp.eq.s32.totalorder %s22, 1
    %p87 = por %p85, %p86
    %p89 = scmp.ne.s32.totalorder %s72, %s88
    %p90 = scmp.eq.s32.totalorder %s22, 0
    %p91 = por %p89, %p90
    %s93 = sadd.s32 %s92, 1
    %p96 = scmp.eq.s32.totalorder %s16, 1
    %p97 = scmp.ne.s32.totalorder %s92, %s94
    %p98 = scmp.eq.s32.totalorder %s16, 0
    %p99 = por %p97, %p98
    %p100 = scmp.ne.s32.totalorder %s92, %s94
    %p101 = scmp.eq.s32.totalorder %s21, 1
    %p102 = por %p100, %p101
    %p103 = scmp.ne.s32.totalorder %s94, %s95
    %p104 = scmp.eq.s32.totalorder %s21, 0
    %p105 = por %p103, %p104
    %p106 = scmp.ne.s32.totalorder %s94, %s95
    %p107 = scmp.eq.s32.totalorder %s22, 1
    %p108 = por %p106, %p107
    %p110 = scmp.ne.s32.totalorder %s95, %s109
    %p111 = scmp.eq.s32.totalorder %s22, 0
    %p112 = por %p110, %p111
    %s114 = sadd.s32 %s113, 1
    %p117 = scmp.eq.s32.totalorder %s16, 1
    %p118 = scmp.ne.s32.totalorder %s113, %s115
    %p119 = scmp.eq.s32.totalorder %s16, 0
    %p120 = por %p118, %p119
    %p121 = scmp.ne.s32.totalorder %s113, %s115
    %p122 = scmp.eq.s32.totalorder %s21, 1
    %p123 = por %p121, %p122
    %p124 = scmp.ne.s32.totalorder %s115, %s116
    %p125 = scmp.eq.s32.totalorder %s21, 0
    %p126 = por %p124, %p125
    %p127 = scmp.ne.s32.totalorder %s115, %s116
    %p128 = scmp.eq.s32.totalorder %s22, 1
    %p129 = por %p127, %p128
    %p131 = scmp.ne.s32.totalorder %s116, %s130
    %p132 = scmp.eq.s32.totalorder %s22, 0
    %p133 = por %p131, %p132
    %s135 = sadd.s32 %s134, 1
    %p138 = scmp.eq.s32.totalorder %s16, 1
    %p139 = scmp.ne.s32.totalorder %s134, %s136
    %p140 = scmp.eq.s32.totalorder %s16, 0
    %p141 = por %p139, %p140
    %p142 = scmp.ne.s32.totalorder %s134, %s136
    %p143 = scmp.eq.s32.totalorder %s21, 1
    %p144 = por %p142, %p143
    %p145 = scmp.ne.s32.totalorder %s136, %s137
    %p146 = scmp.eq.s32.totalorder %s21, 0
    %p147 = por %p145, %p146
    %p148 = scmp.ne.s32.totalorder %s136, %s137
    %p149 = scmp.eq.s32.totalorder %s22, 1
    %p150 = por %p148, %p149
    %p152 = scmp.ne.s32.totalorder %s137, %s151
    %p153 = scmp.eq.s32.totalorder %s22, 0
    %p154 = por %p152, %p153
    %s156 = sadd.s32 %s155, 1
    %p159 = scmp.eq.s32.totalorder %s16, 1
    %p160 = scmp.ne.s32.totalorder %s155, %s157
    %p161 = scmp.eq.s32.totalorder %s16, 0
    %p162 = por %p160, %p161
    %p163 = scmp.ne.s32.totalorder %s155, %s157
    %p164 = scmp.eq.s32.totalorder %s21, 1
    %p165 = por %p163, %p164
    %p166 = scmp.ne.s32.totalorder %s157, %s158
    %p167 = scmp.eq.s32.totalorder %s21, 0
    %p168 = por %p166, %p167
    %p169 = scmp.ne.s32.totalorder %s157, %s158
    %p170 = scmp.eq.s32.totalorder %s22, 1
    %p171 = por %p169, %p170
    %p173 = scmp.ne.s32.totalorder %s158, %s172
    %p174 = scmp.eq.s32.totalorder %s22, 0
    %p175 = por %p173, %p174
    %s177 = sadd.s32 %s176, 1
    %p180 = scmp.eq.s32.totalorder %s16, 1
    %p181 = scmp.ne.s32.totalorder %s176, %s178
    %p182 = scmp.eq.s32.totalorder %s16, 0
    %p183 = por %p181, %p182
    %p184 = scmp.ne.s32.totalorder %s176, %s178
    %p185 = scmp.eq.s32.totalorder %s21, 1
    %p186 = por %p184, %p185
    %p187 = scmp.ne.s32.totalorder %s178, %s179
    %p188 = scmp.eq.s32.totalorder %s21, 0
    %p189 = por %p187, %p188
    %p190 = scmp.ne.s32.totalorder %s178, %s179
    %p191 = scmp.eq.s32.totalorder %s22, 1
    %p192 = por %p190, %p191
    %p194 = scmp.ne.s32.totalorder %s179, %s193
    %p195 = scmp.eq.s32.totalorder %s22, 0
    %p196 = por %p194, %p195
    %s198 = sadd.s32 %s197, 1
    %p201 = scmp.eq.s32.totalorder %s16, 1
    %p202 = scmp.ne.s32.totalorder %s197, %s199
    %p203 = scmp.eq.s32.totalorder %s16, 0
    %p204 = por %p202, %p203
    %p205 = scmp.ne.s32.totalorder %s197, %s199
    %p206 = scmp.eq.s32.totalorder %s21, 1
    %p207 = por %p205, %p206
    %p208 = scmp.ne.s32.totalorder %s199, %s200
    %p209 = scmp.eq.s32.totalorder %s21, 0
    %p210 = por %p208, %p209
    %p211 = scmp.ne.s32.totalorder %s199, %s200
    %p212 = scmp.eq.s32.totalorder %s22, 1
    %p213 = por %p211, %p212
    %p215 = scmp.ne.s32.totalorder %s200, %s214
    %p216 = scmp.eq.s32.totalorder %s22, 0
    %p217 = por %p215, %p216
    %s218 = ssub.s32 %s16, %s23
    %p219 = scmp.eq.s32.totalorder %s218, 0
    %s221 = sadd.s32 %s220, 1
    %s222 = scalar_select %p219, %s220, %s221
    %p225 = pneg %p219
    %p226 = scmp.eq.s32.totalorder %s16, 1
    %p227 = por %p225, %p226
    %p228 = scmp.ne.s32.totalorder %s220, %s223
    %p229 = scmp.eq.s32.totalorder %s16, 0
    %p230 = por %p228, %p229
    %p231 = scmp.ne.s32.totalorder %s220, %s223
    %p232 = scmp.eq.s32.totalorder %s21, 1
    %p233 = por %p231, %p232
    %p234 = scmp.ne.s32.totalorder %s223, %s224
    %p235 = scmp.eq.s32.totalorder %s21, 0
    %p236 = por %p234, %p235
    %p237 = scmp.ne.s32.totalorder %s223, %s224
    %p238 = scmp.eq.s32.totalorder %s22, 1
    %p239 = por %p237, %p238
    %p241 = scmp.ne.s32.totalorder %s224, %s240
    %p242 = scmp.eq.s32.totalorder %s22, 0
    %p243 = por %p241, %p242
    %p244 = scmp.le.s32.totalorder 1, %s16
    %p245 = scmp.lt.s32.totalorder %s16, 3
    %p246 = pnand %p244, %p245
    %p247 = pneg %p246
    // Predicated region
    $region9: #{dense_block_forward.1} parent=5 // pred_check
      _
    $region10: #{dense_block_forward.1} parent=5 // pred_check_branch
      %249 = sbr.rel (%p246) target = $region12
    $region11: #{dense_block_forward.1} parent=5 // pred_region
      %s250 = ssub.s32 %s16, 1
      // Predicated region
      $region13: #{dense_block_forward.1} parent=11 // pred_check
        %p251 = pneg %p37
      $region14: #{dense_block_forward.1} parent=11 // pred_check_branch
        %253 = sbr.rel (%p251) target = $region16
      $region15: #{dense_block_forward.1} parent=11 // pred_region
        _
      $region16: #{dense_block_forward.1} parent=11 // pred_fallthru
        _
      // Predicated region
      $region17: #{dense_block_forward.1} parent=11 // pred_check
        %p254 = pneg %p58
      $region18: #{dense_block_forward.1} parent=11 // pred_check_branch
        %256 = sbr.rel (%p254) target = $region20
      $region19: #{dense_block_forward.1} parent=11 // pred_region
        _
      $region20: #{dense_block_forward.1} parent=11 // pred_fallthru
        _
      // Predicated region
      $region21: #{dense_block_forward.1} parent=11 // pred_check
        %p257 = pneg %p105
      $region22: #{dense_block_forward.1} parent=11 // pred_check_branch
        %259 = sbr.rel (%p257) target = $region24
      $region23: #{dense_block_forward.1} parent=11 // pred_region
        _
      $region24: #{dense_block_forward.1} parent=11 // pred_fallthru
        _
      // Predicated region
      $region25: #{dense_block_forward.1} parent=11 // pred_check
        %p260 = pneg %p126
      $region26: #{dense_block_forward.1} parent=11 // pred_check_branch
        %262 = sbr.rel (%p260) target = $region28
      $region27: #{dense_block_forward.1} parent=11 // pred_region
        _
      $region28: #{dense_block_forward.1} parent=11 // pred_fallthru
        _
      // Predicated region
      $region29: #{dense_block_forward.1} parent=11 // pred_check
        %p263 = pneg %p147
      $region30: #{dense_block_forward.1} parent=11 // pred_check_branch
        %265 = sbr.rel (%p263) target = $region32
      $region31: #{dense_block_forward.1} parent=11 // pred_region
        _
      $region32: #{dense_block_forward.1} parent=11 // pred_fallthru
        _
      // Predicated region
      $region33: #{dense_block_forward.1} parent=11 // pred_check
        %p266 = pneg %p168
      $region34: #{dense_block_forward.1} parent=11 // pred_check_branch
        %268 = sbr.rel (%p266) target = $region36
      $region35: #{dense_block_forward.1} parent=11 // pred_region
        _
      $region36: #{dense_block_forward.1} parent=11 // pred_fallthru
        _
      // Predicated region
      $region37: #{dense_block_forward.1} parent=11 // pred_check
        %p269 = pneg %p189
      $region38: #{dense_block_forward.1} parent=11 // pred_check_branch
        %271 = sbr.rel (%p269) target = $region40
      $region39: #{dense_block_forward.1} parent=11 // pred_region
        _
      $region40: #{dense_block_forward.1} parent=11 // pred_fallthru
        _
      // Predicated region
      $region41: #{dense_block_forward.1} parent=11 // pred_check
        %p272 = pneg %p210
      $region42: #{dense_block_forward.1} parent=11 // pred_check_branch
        %274 = sbr.rel (%p272) target = $region44
      $region43: #{dense_block_forward.1} parent=11 // pred_region
        _
      $region44: #{dense_block_forward.1} parent=11 // pred_fallthru
        _
    $region12: #{dense_block_forward.1} parent=5 // pred_fallthru
      _
    %p275 = scmp.lt.s32.totalorder %s16, 2
    // Predicated region
    $region45: #{dense_block_forward.1} parent=5 // pred_check
      %p276 = pneg %p275
    $region46: #{dense_block_forward.1} parent=5 // pred_check_branch
      %278 = sbr.rel (%p276) target = $region48
    $region47: #{dense_block_forward.1} parent=5 // pred_region
      // Predicated region
      $region49: #{dense_block_forward.1} parent=47 // pred_check
        %p279 = pneg %p78
      $region50: #{dense_block_forward.1} parent=47 // pred_check_branch
        %281 = sbr.rel (%p279) target = $region52
      $region51: #{dense_block_forward.1} parent=47 // pred_region
        %p282 = scmp.lt.s32.totalorder %s16, 1
        %s283 = scalar_select %p282, %s16, 1
        %s284 = smul.addr %s283, 2
        %s285 = smul.addr %s284, 8
        %s286 = scalar_lea.vmem %s2, %s285
      $region52: #{dense_block_forward.1} parent=47 // pred_fallthru
        _
    $region48: #{dense_block_forward.1} parent=5 // pred_fallthru
      _
    %p287 = scmp.le.s32.totalorder 1, %s16
    %p288 = scmp.lt.s32.totalorder %s16, 3
    %p289 = pnand %p287, %p288
    %p290 = pneg %p289
    // Predicated region
    $region53: #{dense_block_forward.1} parent=5 // pred_check
      _
    $region54: #{dense_block_forward.1} parent=5 // pred_check_branch
      %292 = sbr.rel (%p289) target = $region56
    $region55: #{dense_block_forward.1} parent=5 // pred_region
      %s293 = ssub.s32 %s16, 1
      %p294 = pneg %p37
      %p295 = pneg %p34
      %p296 = pneg %p58
      %p297 = pneg %p55
      %p298 = scmp.lt.s32.totalorder %s21, 1
      %s299 = scalar_select %p298, %s21, 1
      %s300 = smul.addr %s299, 2
      %s301 = smul.addr %s300, 8
      %s302 = scalar_lea.vmem %s2, %s301
      %p303 = pneg %p84
      %p304 = pneg %p81
      %p305 = pneg %p105
      %p306 = pneg %p102
      %p307 = pneg %p126
      %p308 = pneg %p123
      %p309 = pneg %p147
      %p310 = pneg %p144
      %p311 = pneg %p168
      %p312 = pneg %p165
      %p313 = pneg %p189
      %p314 = pneg %p186
      %p315 = pneg %p210
      %p316 = pneg %p207
      %p317 = pneg %p236
      %p318 = pneg %p233
      %p319 = scmp.lt.s32.totalorder %s21, 1
      %s320 = scalar_select %p319, %s21, 1
      %s321 = smul.addr %s320, 2
      %s322 = smul.addr %s321, 8
      %s323 = scalar_lea.vmem %s9, %s322
      %p324 = scmp.lt.s32.totalorder %s21, 1
      %s325 = scalar_select %p324, %s21, 1
      %s326 = smul.addr %s325, 2
      %s327 = smul.addr %s326, 8
      %s328 = scalar_lea.vmem %s2, %s327
      %p329 = scmp.lt.s32.totalorder %s21, 1
      %s330 = scalar_select %p329, %s21, 1
      %s331 = smul.addr %s330, 2
      %s332 = smul.addr %s331, 8
      %s333 = scalar_lea.vmem %s9, %s332
      %s335 = sld [smem:[#allocation3]]
      %v336 = vld [vmem:[%s328] sm:$0xff]
      %v337 = vld [vmem:[%s328 + $0x8] sm:$0xff]
      %v338 = vadd.f32 %v336, %v337
      %339 = vadd.xlane.f32.xlu0 %v338
      %v340 = vpop.xlane.xlu0 %339
      %v341 = vrcp.pop 256.0
      %v342 = vmul.f32 256.0, %v341
      %v343 = vsub.f32 1.0, %v342
      %v344 = vmul.f32 %v341, %v343
      %v345 = vadd.f32 %v341, %v344
      %vm346 = vweird.f32 %v341
      %v347 = vsel %vm346, %v341, %v345
      %v348 = vmul.f32 %v340, %v347
      %v349 = vsub.f32 %v336, %v348
      %v350 = vsub.f32 %v337, %v348
      %v351 = vmul.f32 %v349, %v349
      %v352 = vmul.f32 %v350, %v350
      %v353 = vadd.f32 %v351, %v352
      %354 = vadd.xlane.f32.xlu0 %v353
      %v355 = vpop.xlane.xlu0 %354
      %v356 = vmul.f32 %v355, %v347
      %v357 = vadd.f32 %v356, 1e-05
      %v358 = vrsqrt.pop %v357
      %v359 = vmul.f32 %v358, %v357
      %v360 = vmul.f32 %v359, %v358
      %v361 = vmul.f32 0.5, %v360
      %v362 = vsub.f32 1.5, %v361
      %v363 = vmul.f32 %v358, %v362
      %vm364 = vweird.f32 %v357
      %vm365 = vweird.f32 %v358
      %vm366 = vmor %vm364, %vm365
      %v367 = vsel %vm366, %v358, %v363
      %v368 = vmul.f32 %v349, %v367
      %v369 = vmul.f32 %v350, %v367
      %vm370 = vcmp.ge.f32.partialorder %v368, 0.0
      %vm371 = vcmp.ge.f32.partialorder %v369, 0.0
      %v372 = vstv %s335
      %v373 = vmul.f32 %v372, %v368
      %v374 = vmul.f32 %v372, %v369
      %v375 = vsel %vm370, %v368, %v373
      %v376 = vsel %vm371, %v369, %v374
      %377 = vrot.lane.b32.xlu0 %v375, 34
      %v378 = vpop.permute.xlu0 %377
      %379 = vrot.lane.b32.xlu0 %v376, 34
      %v380 = vpop.permute.xlu0 %379
      %v381 = vlaneseq
      %v382 = vand.u32 %v381, 127
      %vm383 = vcmp.lt.s32.totalorder %v382, 34
      %v384 = vsel %vm383, %v378, %v380
      %v385 = vsel %vm383, %v380, %v378
      %v386 = vld [vmem:[%s1] sm:$0x3]
      %v388 = vperm.slane %v386, 0
      %v389 = vperm.slane %v386, 1
      %v392 = vmul.f32 %v385, %v388
      %v393 = vmul.f32 %v384, %v389
      %v394 = vpack.c.bf16 %v393, %v392
      %395 = vst [vmem:[#allocation2] sm:$0xff] %v394
      %396 = vrot.lane.b32.xlu0 %v375, 33
      %v397 = vpop.permute.xlu0 %396
      %398 = vrot.lane.b32.xlu0 %v376, 33
      %v399 = vpop.permute.xlu0 %398
      %vm400 = vcmp.lt.s32.totalorder %v382, 33
      %v401 = vsel %vm400, %v397, %v399
      %v402 = vsel %vm400, %v399, %v397
      %s403 = scalar_lea.vmem %s1, 2
      %v404 = vld [vmem:[%s403] sm:$0x3]
      %v406 = vperm.slane %v404, 0
      %v407 = vperm.slane %v404, 1
      %v410 = vmul.f32 %v402, %v406
      %v411 = vmul.f32 %v401, %v407
      %v412 = vpack.c.bf16 %v411, %v410
      %413 = vst [vmem:[#allocation2 + $0x8] sm:$0xff] %v412
      %414 = vrot.lane.b32.xlu0 %v375, 32
      %v415 = vpop.permute.xlu0 %414
      %416 = vrot.lane.b32.xlu0 %v376, 32
      %v417 = vpop.permute.xlu0 %416
      %vm418 = vcmp.lt.s32.totalorder %v382, 32
      %v419 = vsel %vm418, %v415, %v417
      %v420 = vsel %vm418, %v417, %v415
      %s421 = scalar_lea.vmem %s1, 4
      %v422 = vld [vmem:[%s421] sm:$0x3]
      %v424 = vperm.slane %v422, 0
      %v425 = vperm.slane %v422, 1
      %v428 = vmul.f32 %v420, %v424
      %v429 = vmul.f32 %v419, %v425
      %v430 = vpack.c.bf16 %v429, %v428
      %431 = vst [vmem:[#allocation2 + $0x10] sm:$0xff] %v430
      %432 = vrot.lane.b32.xlu0 %v375, 31
      %v433 = vpop.permute.xlu0 %432
      %434 = vrot.lane.b32.xlu0 %v376, 31
      %v435 = vpop.permute.xlu0 %434
      %vm436 = vcmp.lt.s32.totalorder %v382, 31
      %v437 = vsel %vm436, %v433, %v435
      %v438 = vsel %vm436, %v435, %v433
      %s439 = scalar_lea.vmem %s1, 6
      %v440 = vld [vmem:[%s439] sm:$0x3]
      %v442 = vperm.slane %v440, 0
      %v443 = vperm.slane %v440, 1
      %v446 = vmul.f32 %v438, %v442
      %v447 = vmul.f32 %v437, %v443
      %v448 = vpack.c.bf16 %v447, %v446
      %449 = vst [vmem:[#allocation2 + $0x18] sm:$0xff] %v448
      %450 = vrot.lane.b32.xlu0 %v375, 30
      %v451 = vpop.permute.xlu0 %450
      %452 = vrot.lane.b32.xlu0 %v376, 30
      %v453 = vpop.permute.xlu0 %452
      %vm454 = vcmp.lt.s32.totalorder %v382, 30
      %v455 = vsel %vm454, %v451, %v453
      %v456 = vsel %vm454, %v453, %v451
      %s457 = scalar_lea.vmem %s1, 8
      %v458 = vld [vmem:[%s457] sm:$0x3]
      %v460 = vperm.slane %v458, 0
      %v461 = vperm.slane %v458, 1
      %v464 = vmul.f32 %v456, %v460
      %v465 = vmul.f32 %v455, %v461
      %v466 = vpack.c.bf16 %v465, %v464
      %467 = vst [vmem:[#allocation2 + $0x20] sm:$0xff] %v466
      %468 = vrot.lane.b32.xlu0 %v375, 18
      %v469 = vpop.permute.xlu0 %468
      %470 = vrot.lane.b32.xlu0 %v376, 18
      %v471 = vpop.permute.xlu0 %470
      %vm472 = vcmp.lt.s32.totalorder %v382, 18
      %v473 = vsel %vm472, %v469, %v471
      %v474 = vsel %vm472, %v471, %v469
      %s475 = scalar_lea.vmem %s1, 10
      %v476 = vld [vmem:[%s475] sm:$0x3]
      %v478 = vperm.slane %v476, 0
      %v479 = vperm.slane %v476, 1
      %v482 = vmul.f32 %v474, %v478
      %v483 = vmul.f32 %v473, %v479
      %v484 = vpack.c.bf16 %v483, %v482
      %485 = vst [vmem:[#allocation2 + $0x28] sm:$0xff] %v484
      %486 = vrot.lane.b32.xlu0 %v375, 17
      %v487 = vpop.permute.xlu0 %486
      %488 = vrot.lane.b32.xlu0 %v376, 17
      %v489 = vpop.permute.xlu0 %488
      %vm490 = vcmp.lt.s32.totalorder %v382, 17
      %v491 = vsel %vm490, %v487, %v489
      %v492 = vsel %vm490, %v489, %v487
      %s493 = scalar_lea.vmem %s1, 12
      %v494 = vld [vmem:[%s493] sm:$0x3]
      %v496 = vperm.slane %v494, 0
      %v497 = vperm.slane %v494, 1
      %v500 = vmul.f32 %v492, %v496
      %v501 = vmul.f32 %v491, %v497
      %v502 = vpack.c.bf16 %v501, %v500
      %503 = vst [vmem:[#allocation2 + $0x30] sm:$0xff] %v502
      %504 = vrot.lane.b32.xlu0 %v375, 16
      %v505 = vpop.permute.xlu0 %504
      %506 = vrot.lane.b32.xlu0 %v376, 16
      %v507 = vpop.permute.xlu0 %506
      %vm508 = vcmp.lt.s32.totalorder %v382, 16
      %v509 = vsel %vm508, %v505, %v507
      %v510 = vsel %vm508, %v507, %v505
      %s511 = scalar_lea.vmem %s1, 14
      %v512 = vld [vmem:[%s511] sm:$0x3]
      %v514 = vperm.slane %v512, 0
      %v515 = vperm.slane %v512, 1
      %v518 = vmul.f32 %v510, %v514
      %v519 = vmul.f32 %v509, %v515
      %v520 = vpack.c.bf16 %v519, %v518
      %521 = vst [vmem:[#allocation2 + $0x38] sm:$0xff] %v520
      %522 = vrot.lane.b32.xlu0 %v375, 15
      %v523 = vpop.permute.xlu0 %522
      %524 = vrot.lane.b32.xlu0 %v376, 15
      %v525 = vpop.permute.xlu0 %524
      %vm526 = vcmp.lt.s32.totalorder %v382, 15
      %v527 = vsel %vm526, %v523, %v525
      %v528 = vsel %vm526, %v525, %v523
      %s529 = scalar_lea.vmem %s1, 16
      %v530 = vld [vmem:[%s529] sm:$0x3]
      %v532 = vperm.slane %v530, 0
      %v533 = vperm.slane %v530, 1
      %v536 = vmul.f32 %v528, %v532
      %v537 = vmul.f32 %v527, %v533
      %v538 = vpack.c.bf16 %v537, %v536
      %539 = vst [vmem:[#allocation2 + $0x40] sm:$0xff] %v538
      %540 = vrot.lane.b32.xlu0 %v375, 14
      %v541 = vpop.permute.xlu0 %540
      %542 = vrot.lane.b32.xlu0 %v376, 14
      %v543 = vpop.permute.xlu0 %542
      %vm544 = vcmp.lt.s32.totalorder %v382, 14
      %v545 = vsel %vm544, %v541, %v543
      %v546 = vsel %vm544, %v543, %v541
      %s547 = scalar_lea.vmem %s1, 18
      %v548 = vld [vmem:[%s547] sm:$0x3]
      %v550 = vperm.slane %v548, 0
      %v551 = vperm.slane %v548, 1
      %v554 = vmul.f32 %v546, %v550
      %v555 = vmul.f32 %v545, %v551
      %v556 = vpack.c.bf16 %v555, %v554
      %557 = vst [vmem:[#allocation2 + $0x48] sm:$0xff] %v556
      %558 = vrot.lane.b32.xlu0 %v375, 2
      %v559 = vpop.permute.xlu0 %558
      %560 = vrot.lane.b32.xlu0 %v376, 2
      %v561 = vpop.permute.xlu0 %560
      %vm562 = vcmp.lt.s32.totalorder %v382, 2
      %v563 = vsel %vm562, %v559, %v561
      %v564 = vsel %vm562, %v561, %v559
      %s565 = scalar_lea.vmem %s1, 20
      %v566 = vld [vmem:[%s565] sm:$0x3]
      %v568 = vperm.slane %v566, 0
      %v569 = vperm.slane %v566, 1
      %v572 = vmul.f32 %v564, %v568
      %v573 = vmul.f32 %v563, %v569
      %v574 = vpack.c.bf16 %v573, %v572
      %575 = vst [vmem:[#allocation2 + $0x50] sm:$0xff] %v574
      %576 = vrot.lane.b32.xlu0 %v375, 1
      %v577 = vpop.permute.xlu0 %576
      %578 = vrot.lane.b32.xlu0 %v376, 1
      %v579 = vpop.permute.xlu0 %578
      %vm580 = vcmp.lt.s32.totalorder %v382, 1
      %v581 = vsel %vm580, %v577, %v579
      %v582 = vsel %vm580, %v579, %v577
      %s583 = scalar_lea.vmem %s1, 22
      %v584 = vld [vmem:[%s583] sm:$0x3]
      %v586 = vperm.slane %v584, 0
      %v587 = vperm.slane %v584, 1
      %v590 = vmul.f32 %v582, %v586
      %v591 = vmul.f32 %v581, %v587
      %v592 = vpack.c.bf16 %v591, %v590
      %593 = vst [vmem:[#allocation2 + $0x58] sm:$0xff] %v592
      %s594 = scalar_lea.vmem %s1, 24
      %v595 = vld [vmem:[%s594] sm:$0x3]
      %v597 = vperm.slane %v595, 0
      %v598 = vperm.slane %v595, 1
      %v601 = vmul.f32 %v375, %v597
      %v602 = vmul.f32 %v376, %v598
      %v603 = vpack.c.bf16 %v602, %v601
      %604 = vst [vmem:[#allocation2 + $0x60] sm:$0xff] %v603
      %605 = vrot.lane.b32.xlu0 %v375, 127
      %v606 = vpop.permute.xlu0 %605
      %607 = vrot.lane.b32.xlu0 %v376, 127
      %v608 = vpop.permute.xlu0 %607
      %vm609 = vcmp.lt.s32.totalorder %v382, 127
      %v610 = vsel %vm609, %v606, %v608
      %v611 = vsel %vm609, %v608, %v606
      %s612 = scalar_lea.vmem %s1, 26
      %v613 = vld [vmem:[%s612] sm:$0x3]
      %v615 = vperm.slane %v613, 0
      %v616 = vperm.slane %v613, 1
      %v619 = vmul.f32 %v610, %v615
      %v620 = vmul.f32 %v611, %v616
      %v621 = vpack.c.bf16 %v620, %v619
      %622 = vst [vmem:[#allocation2 + $0x68] sm:$0xff] %v621
      %623 = vrot.lane.b32.xlu0 %v375, 126
      %v624 = vpop.permute.xlu0 %623
      %625 = vrot.lane.b32.xlu0 %v376, 126
      %v626 = vpop.permute.xlu0 %625
      %vm627 = vcmp.lt.s32.totalorder %v382, 126
      %v628 = vsel %vm627, %v624, %v626
      %v629 = vsel %vm627, %v626, %v624
      %s630 = scalar_lea.vmem %s1, 28
      %v631 = vld [vmem:[%s630] sm:$0x3]
      %v633 = vperm.slane %v631, 0
      %v634 = vperm.slane %v631, 1
      %v637 = vmul.f32 %v628, %v633
      %v638 = vmul.f32 %v629, %v634
      %v639 = vpack.c.bf16 %v638, %v637
      %640 = vst [vmem:[#allocation2 + $0x70] sm:$0xff] %v639
      %641 = vrot.lane.b32.xlu0 %v375, 114
      %v642 = vpop.permute.xlu0 %641
      %643 = vrot.lane.b32.xlu0 %v376, 114
      %v644 = vpop.permute.xlu0 %643
      %vm645 = vcmp.lt.s32.totalorder %v382, 114
      %v646 = vsel %vm645, %v642, %v644
      %v647 = vsel %vm645, %v644, %v642
      %s648 = scalar_lea.vmem %s1, 30
      %v649 = vld [vmem:[%s648] sm:$0x3]
      %v651 = vperm.slane %v649, 0
      %v652 = vperm.slane %v649, 1
      %v655 = vmul.f32 %v646, %v651
      %v656 = vmul.f32 %v647, %v652
      %v657 = vpack.c.bf16 %v656, %v655
      %658 = vst [vmem:[#allocation2 + $0x78] sm:$0xff] %v657
      %659 = vrot.lane.b32.xlu0 %v375, 113
      %v660 = vpop.permute.xlu0 %659
      %661 = vrot.lane.b32.xlu0 %v376, 113
      %v662 = vpop.permute.xlu0 %661
      %vm663 = vcmp.lt.s32.totalorder %v382, 113
      %v664 = vsel %vm663, %v660, %v662
      %v665 = vsel %vm663, %v662, %v660
      %s666 = scalar_lea.vmem %s1, 32
      %v667 = vld [vmem:[%s666] sm:$0x3]
      %v669 = vperm.slane %v667, 0
      %v670 = vperm.slane %v667, 1
      %v673 = vmul.f32 %v664, %v669
      %v674 = vmul.f32 %v665, %v670
      %v675 = vpack.c.bf16 %v674, %v673
      %676 = vst [vmem:[#allocation2 + $0x80] sm:$0xff] %v675
      %677 = vrot.lane.b32.xlu0 %v375, 112
      %v678 = vpop.permute.xlu0 %677
      %679 = vrot.lane.b32.xlu0 %v376, 112
      %v680 = vpop.permute.xlu0 %679
      %vm681 = vcmp.lt.s32.totalorder %v382, 112
      %v682 = vsel %vm681, %v678, %v680
      %v683 = vsel %vm681, %v680, %v678
      %s684 = scalar_lea.vmem %s1, 34
      %v685 = vld [vmem:[%s684] sm:$0x3]
      %v687 = vperm.slane %v685, 0
      %v688 = vperm.slane %v685, 1
      %v691 = vmul.f32 %v682, %v687
      %v692 = vmul.f32 %v683, %v688
      %v693 = vpack.c.bf16 %v692, %v691
      %694 = vst [vmem:[#allocation2 + $0x88] sm:$0xff] %v693
      %695 = vrot.lane.b32.xlu0 %v375, 111
      %v696 = vpop.permute.xlu0 %695
      %697 = vrot.lane.b32.xlu0 %v376, 111
      %v698 = vpop.permute.xlu0 %697
      %vm699 = vcmp.lt.s32.totalorder %v382, 111
      %v700 = vsel %vm699, %v696, %v698
      %v701 = vsel %vm699, %v698, %v696
      %s702 = scalar_lea.vmem %s1, 36
      %v703 = vld [vmem:[%s702] sm:$0x3]
      %v705 = vperm.slane %v703, 0
      %v706 = vperm.slane %v703, 1
      %v709 = vmul.f32 %v700, %v705
      %v710 = vmul.f32 %v701, %v706
      %v711 = vpack.c.bf16 %v710, %v709
      %712 = vst [vmem:[#allocation2 + $0x90] sm:$0xff] %v711
      %713 = vrot.lane.b32.xlu0 %v375, 110
      %v714 = vpop.permute.xlu0 %713
      %715 = vrot.lane.b32.xlu0 %v376, 110
      %v716 = vpop.permute.xlu0 %715
      %vm717 = vcmp.lt.s32.totalorder %v382, 110
      %v718 = vsel %vm717, %v714, %v716
      %v719 = vsel %vm717, %v716, %v714
      %s720 = scalar_lea.vmem %s1, 38
      %v721 = vld [vmem:[%s720] sm:$0x3]
      %v723 = vperm.slane %v721, 0
      %v724 = vperm.slane %v721, 1
      %v727 = vmul.f32 %v718, %v723
      %v728 = vmul.f32 %v719, %v724
      %v729 = vpack.c.bf16 %v728, %v727
      %730 = vst [vmem:[#allocation2 + $0x98] sm:$0xff] %v729
      %731 = vrot.lane.b32.xlu0 %v375, 98
      %v732 = vpop.permute.xlu0 %731
      %733 = vrot.lane.b32.xlu0 %v376, 98
      %v734 = vpop.permute.xlu0 %733
      %vm735 = vcmp.lt.s32.totalorder %v382, 98
      %v736 = vsel %vm735, %v732, %v734
      %v737 = vsel %vm735, %v734, %v732
      %s738 = scalar_lea.vmem %s1, 40
      %v739 = vld [vmem:[%s738] sm:$0x3]
      %v741 = vperm.slane %v739, 0
      %v742 = vperm.slane %v739, 1
      %v745 = vmul.f32 %v736, %v741
      %v746 = vmul.f32 %v737, %v742
      %v747 = vpack.c.bf16 %v746, %v745
      %748 = vst [vmem:[#allocation2 + $0xa0] sm:$0xff] %v747
      %749 = vrot.lane.b32.xlu0 %v375, 97
      %v750 = vpop.permute.xlu0 %749
      %751 = vrot.lane.b32.xlu0 %v376, 97
      %v752 = vpop.permute.xlu0 %751
      %vm753 = vcmp.lt.s32.totalorder %v382, 97
      %v754 = vsel %vm753, %v750, %v752
      %v755 = vsel %vm753, %v752, %v750
      %s756 = scalar_lea.vmem %s1, 42
      %v757 = vld [vmem:[%s756] sm:$0x3]
      %v759 = vperm.slane %v757, 0
      %v760 = vperm.slane %v757, 1
      %v763 = vmul.f32 %v754, %v759
      %v764 = vmul.f32 %v755, %v760
      %v765 = vpack.c.bf16 %v764, %v763
      %766 = vst [vmem:[#allocation2 + $0xa8] sm:$0xff] %v765
      %767 = vrot.lane.b32.xlu0 %v375, 96
      %v768 = vpop.permute.xlu0 %767
      %769 = vrot.lane.b32.xlu0 %v376, 96
      %v770 = vpop.permute.xlu0 %769
      %vm771 = vcmp.lt.s32.totalorder %v382, 96
      %v772 = vsel %vm771, %v768, %v770
      %v773 = vsel %vm771, %v770, %v768
      %s774 = scalar_lea.vmem %s1, 44
      %v775 = vld [vmem:[%s774] sm:$0x3]
      %v777 = vperm.slane %v775, 0
      %v778 = vperm.slane %v775, 1
      %v781 = vmul.f32 %v772, %v777
      %v782 = vmul.f32 %v773, %v778
      %v783 = vpack.c.bf16 %v782, %v781
      %784 = vst [vmem:[#allocation2 + $0xb0] sm:$0xff] %v783
      %785 = vrot.lane.b32.xlu0 %v375, 95
      %v786 = vpop.permute.xlu0 %785
      %787 = vrot.lane.b32.xlu0 %v376, 95
      %v788 = vpop.permute.xlu0 %787
      %vm789 = vcmp.lt.s32.totalorder %v382, 95
      %v790 = vsel %vm789, %v786, %v788
      %v791 = vsel %vm789, %v788, %v786
      %s792 = scalar_lea.vmem %s1, 46
      %v793 = vld [vmem:[%s792] sm:$0x3]
      %v795 = vperm.slane %v793, 0
      %v796 = vperm.slane %v793, 1
      %v799 = vmul.f32 %v790, %v795
      %v800 = vmul.f32 %v791, %v796
      %v801 = vpack.c.bf16 %v800, %v799
      %802 = vst [vmem:[#allocation2 + $0xb8] sm:$0xff] %v801
      %803 = vrot.lane.b32.xlu0 %v375, 94
      %v804 = vpop.permute.xlu0 %803
      %805 = vrot.lane.b32.xlu0 %v376, 94
      %v806 = vpop.permute.xlu0 %805
      %vm807 = vcmp.lt.s32.totalorder %v382, 94
      %v808 = vsel %vm807, %v804, %v806
      %v809 = vsel %vm807, %v806, %v804
      %s810 = scalar_lea.vmem %s1, 48
      %v811 = vld [vmem:[%s810] sm:$0x3]
      %v813 = vperm.slane %v811, 0
      %v814 = vperm.slane %v811, 1
      %v817 = vmul.f32 %v808, %v813
      %v818 = vmul.f32 %v809, %v814
      %v819 = vpack.c.bf16 %v818, %v817
      %820 = vst [vmem:[#allocation2 + $0xc0] sm:$0xff] %v819
      %v821 = vld [vmem:[%s3] sm:$0xff]
      %v822 = vld [vmem:[#allocation2] sm:$0xff]
      %v823 = vld [vmem:[#allocation2 + $0x8] sm:$0xff]
      %v824 = vld [vmem:[#allocation2 + $0x10] sm:$0xff]
      %v825 = vld [vmem:[#allocation2 + $0x18] sm:$0xff]
      %v826 = vld [vmem:[#allocation2 + $0x20] sm:$0xff]
      %v827 = vld [vmem:[#allocation2 + $0x28] sm:$0xff]
      %v828 = vld [vmem:[#allocation2 + $0x30] sm:$0xff]
      %v829 = vld [vmem:[#allocation2 + $0x38] sm:$0xff]
      %v830 = vld [vmem:[#allocation2 + $0x40] sm:$0xff]
      %v831 = vld [vmem:[#allocation2 + $0x48] sm:$0xff]
      %v832 = vld [vmem:[#allocation2 + $0x50] sm:$0xff]
      %v833 = vld [vmem:[#allocation2 + $0x58] sm:$0xff]
      %v834 = vld [vmem:[#allocation2 + $0x60] sm:$0xff]
      %v835 = vld [vmem:[#allocation2 + $0x68] sm:$0xff]
      %v836 = vld [vmem:[#allocation2 + $0x70] sm:$0xff]
      %v837 = vld [vmem:[#allocation2 + $0x78] sm:$0xff]
      %v838 = vld [vmem:[#allocation2 + $0x80] sm:$0xff]
      %v839 = vld [vmem:[#allocation2 + $0x88] sm:$0xff]
      %v840 = vld [vmem:[#allocation2 + $0x90] sm:$0xff]
      %v841 = vld [vmem:[#allocation2 + $0x98] sm:$0xff]
      %v842 = vld [vmem:[#allocation2 + $0xa0] sm:$0xff]
      %v843 = vld [vmem:[#allocation2 + $0xa8] sm:$0xff]
      %v844 = vld [vmem:[#allocation2 + $0xb0] sm:$0xff]
      %v845 = vld [vmem:[#allocation2 + $0xb8] sm:$0xff]
      %v846 = vld [vmem:[#allocation2 + $0xc0] sm:$0xff]
      %v847 = vld [vmem:[%s6] sm:$0xff]
      %849 = vset.pattern.permute.xlu0 0
      %850 = vperm.xlu0 %849, %v847
      %v851 = vpop.permute.xlu0 %850
      %v854 = vunpack.c.l.b16 %v821
      %v855 = vunpack.c.h.b16 %v821
      %v856 = vpack.c.b16 %v854, %v854
      %v857 = vpack.c.b16 %v855, %v855
      %v884 = vunpack.c.l.b16 %v822
      %v885 = vunpack.c.h.b16 %v822
      %v886 = vunpack.c.l.b16 %v823
      %v887 = vunpack.c.h.b16 %v823
      %v888 = vunpack.c.l.b16 %v824
      %v889 = vunpack.c.h.b16 %v824
      %v890 = vunpack.c.l.b16 %v825
      %v891 = vunpack.c.h.b16 %v825
      %v892 = vunpack.c.l.b16 %v826
      %v893 = vunpack.c.h.b16 %v826
      %v894 = vunpack.c.l.b16 %v827
      %v895 = vunpack.c.h.b16 %v827
      %v896 = vunpack.c.l.b16 %v828
      %v897 = vunpack.c.h.b16 %v828
      %v898 = vunpack.c.l.b16 %v829
      %v899 = vunpack.c.h.b16 %v829
      %v900 = vunpack.c.l.b16 %v830
      %v901 = vunpack.c.h.b16 %v830
      %v902 = vunpack.c.l.b16 %v831
      %v903 = vunpack.c.h.b16 %v831
      %v904 = vunpack.c.l.b16 %v832
      %v905 = vunpack.c.h.b16 %v832
      %v906 = vunpack.c.l.b16 %v833
      %v907 = vunpack.c.h.b16 %v833
      %v908 = vunpack.c.l.b16 %v834
      %v909 = vunpack.c.h.b16 %v834
      %v910 = vunpack.c.l.b16 %v835
      %v911 = vunpack.c.h.b16 %v835
      %v912 = vunpack.c.l.b16 %v836
      %v913 = vunpack.c.h.b16 %v836
      %v914 = vunpack.c.l.b16 %v837
      %v915 = vunpack.c.h.b16 %v837
      %v916 = vunpack.c.l.b16 %v838
      %v917 = vunpack.c.h.b16 %v838
      %v918 = vunpack.c.l.b16 %v839
      %v919 = vunpack.c.h.b16 %v839
      %v920 = vunpack.c.l.b16 %v840
      %v921 = vunpack.c.h.b16 %v840
      %v922 = vunpack.c.l.b16 %v841
      %v923 = vunpack.c.h.b16 %v841
      %v924 = vunpack.c.l.b16 %v842
      %v925 = vunpack.c.h.b16 %v842
      %v926 = vunpack.c.l.b16 %v843
      %v927 = vunpack.c.h.b16 %v843
      %v928 = vunpack.c.l.b16 %v844
      %v929 = vunpack.c.h.b16 %v844
      %v930 = vunpack.c.l.b16 %v845
      %v931 = vunpack.c.h.b16 %v845
      %v932 = vunpack.c.l.b16 %v846
      %v933 = vunpack.c.h.b16 %v846
      %v934 = vpack.c.b16 %v886, %v884
      %v935 = vpack.c.b16 %v887, %v885
      %v936 = vpack.c.b16 %v890, %v888
      %v937 = vpack.c.b16 %v891, %v889
      %v938 = vpack.c.b16 %v894, %v892
      %v939 = vpack.c.b16 %v895, %v893
      %v940 = vpack.c.b16 %v898, %v896
      %v941 = vpack.c.b16 %v899, %v897
      %v942 = vpack.c.b16 %v902, %v900
      %v943 = vpack.c.b16 %v903, %v901
      %v944 = vpack.c.b16 %v906, %v904
      %v945 = vpack.c.b16 %v907, %v905
      %v946 = vpack.c.b16 %v910, %v908
      %v947 = vpack.c.b16 %v911, %v909
      %v948 = vpack.c.b16 %v914, %v912
      %v949 = vpack.c.b16 %v915, %v913
      %v950 = vpack.c.b16 %v918, %v916
      %v951 = vpack.c.b16 %v919, %v917
      %v952 = vpack.c.b16 %v922, %v920
      %v953 = vpack.c.b16 %v923, %v921
      %v954 = vpack.c.b16 %v926, %v924
      %v955 = vpack.c.b16 %v927, %v925
      %v956 = vpack.c.b16 %v930, %v928
      %v957 = vpack.c.b16 %v931, %v929
      %v958 = vpack.c.b16 %v932, %v932
      %v959 = vpack.c.b16 %v933, %v933
      %vm984 = vcmask 588800
      %v986 = vsel %vm984, %v857, 0
      %vm988 = vcmask 1043456
      %v990 = vsel %vm988, %v958, 0
      %v993 = vsel %vm988, %v959, 0
      %995 = vmatpush.bf16.msra.mxu0 %v948
      %996 = vmatpush.bf16.msra.mxu0 %v946
      %997 = vmatpush.bf16.msra.mxu0 %v944
      %998 = vmatpush.bf16.msra.mxu0 %v942
      %999 = vmatpush.bf16.msra.mxu0 %v940
      %1000 = vmatpush.bf16.msra.mxu0 %v938
      %1001 = vmatpush.bf16.msra.mxu0 %v936
      %1002 = vmatpush.bf16.msra.mxu0 %v934
      %1003 = vmatmul.bf16.gmra.mxu0 %v856
      %v1004 = vpop.f32.mrf.mxu0
      %v1005 = vadd.f32 %v851, %v1004
      %v1006 = vpop.f32.mrf.mxu0
      %1007 = vdwg.mxu0
      %1008 = vmatpush.bf16.msra.mxu0 0
      %1009 = vmatpush.bf16.msra.mxu0 0
      %1010 = vmatpush.bf16.msra.mxu0 0
      %1011 = vmatpush.bf16.msra.mxu0 %v990
      %1012 = vmatpush.bf16.msra.mxu0 %v956
      %1013 = vmatpush.bf16.msra.mxu0 %v954
      %1014 = vmatpush.bf16.msra.mxu0 %v952
      %1015 = vmatpush.bf16.msra.mxu0 %v950
      %1016 = vmatmul.bf16.gmra.mxu0 %v986
      %v1017 = vpop.f32.mrf.mxu0
      %v1018 = vadd.f32 %v1005, %v1017
      %v1019 = vpop.f32.mrf.mxu0
      %1020 = vdwg.mxu0
      %1021 = vmatpush.bf16.msra.mxu0 %v949
      %1022 = vmatpush.bf16.msra.mxu0 %v947
      %1023 = vmatpush.bf16.msra.mxu0 %v945
      %1024 = vmatpush.bf16.msra.mxu0 %v943
      %1025 = vmatpush.bf16.msra.mxu0 %v941
      %1026 = vmatpush.bf16.msra.mxu0 %v939
      %1027 = vmatpush.bf16.msra.mxu0 %v937
      %1028 = vmatpush.bf16.msra.mxu0 %v935
      %1029 = vmatmul.bf16.gmra.mxu0 %v856
      %v1030 = vpop.f32.mrf.mxu0
      %v1031 = vadd.f32 %v851, %v1030
      %v1032 = vpop.f32.mrf.mxu0
      %1033 = vdwg.mxu0
      %1034 = vmatpush.bf16.msra.mxu0 0
      %1035 = vmatpush.bf16.msra.mxu0 0
      %1036 = vmatpush.bf16.msra.mxu0 0
      %1037 = vmatpush.bf16.msra.mxu0 %v993
      %1038 = vmatpush.bf16.msra.mxu0 %v957
      %1039 = vmatpush.bf16.msra.mxu0 %v955
      %1040 = vmatpush.bf16.msra.mxu0 %v953
      %1041 = vmatpush.bf16.msra.mxu0 %v951
      %1042 = vmatmul.bf16.gmra.mxu0 %v986
      %v1043 = vpop.f32.mrf.mxu0
      %v1044 = vadd.f32 %v1031, %v1043
      %v1045 = vpop.f32.mrf.mxu0
      %1046 = vdwg.mxu0
      %v1047 = vadd.f32 %v1018, %v1044
      %1048 = vadd.xlane.f32.xlu0 %v1047
      %v1049 = vpop.xlane.xlu0 %1048
      %v1050 = vmul.f32 %v1049, %v347
      %v1051 = vsub.f32 %v1018, %v1050
      %v1052 = vsub.f32 %v1044, %v1050
      %v1053 = vmul.f32 %v1051, %v1051
      %v1054 = vmul.f32 %v1052, %v1052
      %v1055 = vadd.f32 %v1053, %v1054
      %1056 = vadd.xlane.f32.xlu0 %v1055
      %v1057 = vpop.xlane.xlu0 %1056
      %v1058 = vmul.f32 %v1057, %v347
      %v1059 = vadd.f32 %v1058, 1e-05
      %v1060 = vrsqrt.pop %v1059
      %v1061 = vmul.f32 %v1060, %v1059
      %v1062 = vmul.f32 %v1061, %v1060
      %v1063 = vmul.f32 0.5, %v1062
      %v1064 = vsub.f32 1.5, %v1063
      %v1065 = vmul.f32 %v1060, %v1064
      %vm1066 = vweird.f32 %v1059
      %vm1067 = vweird.f32 %v1060
      %vm1068 = vmor %vm1066, %vm1067
      %v1069 = vsel %vm1068, %v1060, %v1065
      %v1070 = vmul.f32 %v1051, %v1069
      %v1071 = vmul.f32 %v1052, %v1069
      %vm1072 = vcmp.ge.f32.partialorder %v1070, 0.0
      %vm1073 = vcmp.ge.f32.partialorder %v1071, 0.0
      %v1074 = vmul.f32 %v372, %v1070
      %v1075 = vmul.f32 %v372, %v1071
      %v1076 = vsel %vm1072, %v1070, %v1074
      %v1077 = vsel %vm1073, %v1071, %v1075
      %1078 = vrot.lane.b32.xlu0 %v1076, 34
      %v1079 = vpop.permute.xlu0 %1078
      %1080 = vrot.lane.b32.xlu0 %v1077, 34
      %v1081 = vpop.permute.xlu0 %1080
      %v1082 = vsel %vm383, %v1079, %v1081
      %v1083 = vsel %vm383, %v1081, %v1079
      %v1084 = vld [vmem:[%s1] sm:$0x3]
      %v1086 = vperm.slane %v1084, 0
      %v1087 = vperm.slane %v1084, 1
      %v1090 = vmul.f32 %v1083, %v1086
      %v1091 = vmul.f32 %v1082, %v1087
      %v1092 = vpack.c.bf16 %v1091, %v1090
      %1093 = vst [vmem:[#allocation2 + $0xc8] sm:$0xff] %v1092
      %1094 = vrot.lane.b32.xlu0 %v1076, 33
      %v1095 = vpop.permute.xlu0 %1094
      %1096 = vrot.lane.b32.xlu0 %v1077, 33
      %v1097 = vpop.permute.xlu0 %1096
      %v1098 = vsel %vm400, %v1095, %v1097
      %v1099 = vsel %vm400, %v1097, %v1095
      %v1100 = vld [vmem:[%s403] sm:$0x3]
      %v1102 = vperm.slane %v1100, 0
      %v1103 = vperm.slane %v1100, 1
      %v1106 = vmul.f32 %v1099, %v1102
      %v1107 = vmul.f32 %v1098, %v1103
      %v1108 = vpack.c.bf16 %v1107, %v1106
      %1109 = vst [vmem:[#allocation2 + $0xd0] sm:$0xff] %v1108
      %1110 = vrot.lane.b32.xlu0 %v1076, 32
      %v1111 = vpop.permute.xlu0 %1110
      %1112 = vrot.lane.b32.xlu0 %v1077, 32
      %v1113 = vpop.permute.xlu0 %1112
      %v1114 = vsel %vm418, %v1111, %v1113
      %v1115 = vsel %vm418, %v1113, %v1111
      %v1116 = vld [vmem:[%s421] sm:$0x3]
      %v1118 = vperm.slane %v1116, 0
      %v1119 = vperm.slane %v1116, 1
      %v1122 = vmul.f32 %v1115, %v1118
      %v1123 = vmul.f32 %v1114, %v1119
      %v1124 = vpack.c.bf16 %v1123, %v1122
      %1125 = vst [vmem:[#allocation2 + $0xd8] sm:$0xff] %v1124
      %1126 = vrot.lane.b32.xlu0 %v1076, 31
      %v1127 = vpop.permute.xlu0 %1126
      %1128 = vrot.lane.b32.xlu0 %v1077, 31
      %v1129 = vpop.permute.xlu0 %1128
      %v1130 = vsel %vm436, %v1127, %v1129
      %v1131 = vsel %vm436, %v1129, %v1127
      %v1132 = vld [vmem:[%s439] sm:$0x3]
      %v1134 = vperm.slane %v1132, 0
      %v1135 = vperm.slane %v1132, 1
      %v1138 = vmul.f32 %v1131, %v1134
      %v1139 = vmul.f32 %v1130, %v1135
      %v1140 = vpack.c.bf16 %v1139, %v1138
      %1141 = vst [vmem:[#allocation2 + $0xe0] sm:$0xff] %v1140
      %1142 = vrot.lane.b32.xlu0 %v1076, 30
      %v1143 = vpop.permute.xlu0 %1142
      %1144 = vrot.lane.b32.xlu0 %v1077, 30
      %v1145 = vpop.permute.xlu0 %1144
      %v1146 = vsel %vm454, %v1143, %v1145
      %v1147 = vsel %vm454, %v1145, %v1143
      %v1148 = vld [vmem:[%s457] sm:$0x3]
      %v1150 = vperm.slane %v1148, 0
      %v1151 = vperm.slane %v1148, 1
      %v1154 = vmul.f32 %v1147, %v1150
      %v1155 = vmul.f32 %v1146, %v1151
      %v1156 = vpack.c.bf16 %v1155, %v1154
      %1157 = vst [vmem:[#allocation2 + $0xe8] sm:$0xff] %v1156
      %1158 = vrot.lane.b32.xlu0 %v1076, 18
      %v1159 = vpop.permute.xlu0 %1158
      %1160 = vrot.lane.b32.xlu0 %v1077, 18
      %v1161 = vpop.permute.xlu0 %1160
      %v1162 = vsel %vm472, %v1159, %v1161
      %v1163 = vsel %vm472, %v1161, %v1159
      %v1164 = vld [vmem:[%s475] sm:$0x3]
      %v1166 = vperm.slane %v1164, 0
      %v1167 = vperm.slane %v1164, 1
      %v1170 = vmul.f32 %v1163, %v1166
      %v1171 = vmul.f32 %v1162, %v1167
      %v1172 = vpack.c.bf16 %v1171, %v1170
      %1173 = vst [vmem:[#allocation2 + $0xf0] sm:$0xff] %v1172
      %1174 = vrot.lane.b32.xlu0 %v1076, 17
      %v1175 = vpop.permute.xlu0 %1174
      %1176 = vrot.lane.b32.xlu0 %v1077, 17
      %v1177 = vpop.permute.xlu0 %1176
      %v1178 = vsel %vm490, %v1175, %v1177
      %v1179 = vsel %vm490, %v1177, %v1175
      %v1180 = vld [vmem:[%s493] sm:$0x3]
      %v1182 = vperm.slane %v1180, 0
      %v1183 = vperm.slane %v1180, 1
      %v1186 = vmul.f32 %v1179, %v1182
      %v1187 = vmul.f32 %v1178, %v1183
      %v1188 = vpack.c.bf16 %v1187, %v1186
      %1189 = vst [vmem:[#allocation2 + $0xf8] sm:$0xff] %v1188
      %1190 = vrot.lane.b32.xlu0 %v1076, 16
      %v1191 = vpop.permute.xlu0 %1190
      %1192 = vrot.lane.b32.xlu0 %v1077, 16
      %v1193 = vpop.permute.xlu0 %1192
      %v1194 = vsel %vm508, %v1191, %v1193
      %v1195 = vsel %vm508, %v1193, %v1191
      %v1196 = vld [vmem:[%s511] sm:$0x3]
      %v1198 = vperm.slane %v1196, 0
      %v1199 = vperm.slane %v1196, 1
      %v1202 = vmul.f32 %v1195, %v1198
      %v1203 = vmul.f32 %v1194, %v1199
      %v1204 = vpack.c.bf16 %v1203, %v1202
      %1205 = vst [vmem:[#allocation2 + $0x100] sm:$0xff] %v1204
      %1206 = vrot.lane.b32.xlu0 %v1076, 15
      %v1207 = vpop.permute.xlu0 %1206
      %1208 = vrot.lane.b32.xlu0 %v1077, 15
      %v1209 = vpop.permute.xlu0 %1208
      %v1210 = vsel %vm526, %v1207, %v1209
      %v1211 = vsel %vm526, %v1209, %v1207
      %v1212 = vld [vmem:[%s529] sm:$0x3]
      %v1214 = vperm.slane %v1212, 0
      %v1215 = vperm.slane %v1212, 1
      %v1218 = vmul.f32 %v1211, %v1214
      %v1219 = vmul.f32 %v1210, %v1215
      %v1220 = vpack.c.bf16 %v1219, %v1218
      %1221 = vst [vmem:[#allocation2 + $0x108] sm:$0xff] %v1220
      %1222 = vrot.lane.b32.xlu0 %v1076, 14
      %v1223 = vpop.permute.xlu0 %1222
      %1224 = vrot.lane.b32.xlu0 %v1077, 14
      %v1225 = vpop.permute.xlu0 %1224
      %v1226 = vsel %vm544, %v1223, %v1225
      %v1227 = vsel %vm544, %v1225, %v1223
      %v1228 = vld [vmem:[%s547] sm:$0x3]
      %v1230 = vperm.slane %v1228, 0
      %v1231 = vperm.slane %v1228, 1
      %v1234 = vmul.f32 %v1227, %v1230
      %v1235 = vmul.f32 %v1226, %v1231
      %v1236 = vpack.c.bf16 %v1235, %v1234
      %1237 = vst [vmem:[#allocation2 + $0x110] sm:$0xff] %v1236
      %1238 = vrot.lane.b32.xlu0 %v1076, 2
      %v1239 = vpop.permute.xlu0 %1238
      %1240 = vrot.lane.b32.xlu0 %v1077, 2
      %v1241 = vpop.permute.xlu0 %1240
      %v1242 = vsel %vm562, %v1239, %v1241
      %v1243 = vsel %vm562, %v1241, %v1239
      %v1244 = vld [vmem:[%s565] sm:$0x3]
      %v1246 = vperm.slane %v1244, 0
      %v1247 = vperm.slane %v1244, 1
      %v1250 = vmul.f32 %v1243, %v1246
      %v1251 = vmul.f32 %v1242, %v1247
      %v1252 = vpack.c.bf16 %v1251, %v1250
      %1253 = vst [vmem:[#allocation2 + $0x118] sm:$0xff] %v1252
      %1254 = vrot.lane.b32.xlu0 %v1076, 1
      %v1255 = vpop.permute.xlu0 %1254
      %1256 = vrot.lane.b32.xlu0 %v1077, 1
      %v1257 = vpop.permute.xlu0 %1256
      %v1258 = vsel %vm580, %v1255, %v1257
      %v1259 = vsel %vm580, %v1257, %v1255
      %v1260 = vld [vmem:[%s583] sm:$0x3]
      %v1262 = vperm.slane %v1260, 0
      %v1263 = vperm.slane %v1260, 1
      %v1266 = vmul.f32 %v1259, %v1262
      %v1267 = vmul.f32 %v1258, %v1263
      %v1268 = vpack.c.bf16 %v1267, %v1266
      %1269 = vst [vmem:[#allocation2 + $0x120] sm:$0xff] %v1268
      %v1270 = vld [vmem:[%s594] sm:$0x3]
      %v1272 = vperm.slane %v1270, 0
      %v1273 = vperm.slane %v1270, 1
      %v1276 = vmul.f32 %v1076, %v1272
      %v1277 = vmul.f32 %v1077, %v1273
      %v1278 = vpack.c.bf16 %v1277, %v1276
      %1279 = vst [vmem:[#allocation2 + $0x128] sm:$0xff] %v1278
      %1280 = vrot.lane.b32.xlu0 %v1076, 127
      %v1281 = vpop.permute.xlu0 %1280
      %1282 = vrot.lane.b32.xlu0 %v1077, 127
      %v1283 = vpop.permute.xlu0 %1282
      %v1284 = vsel %vm609, %v1281, %v1283
      %v1285 = vsel %vm609, %v1283, %v1281
      %v1286 = vld [vmem:[%s612] sm:$0x3]
      %v1288 = vperm.slane %v1286, 0
      %v1289 = vperm.slane %v1286, 1
      %v1292 = vmul.f32 %v1284, %v1288
      %v1293 = vmul.f32 %v1285, %v1289
      %v1294 = vpack.c.bf16 %v1293, %v1292
      %1295 = vst [vmem:[#allocation2 + $0x130] sm:$0xff] %v1294
      %1296 = vrot.lane.b32.xlu0 %v1076, 126
      %v1297 = vpop.permute.xlu0 %1296
      %1298 = vrot.lane.b32.xlu0 %v1077, 126
      %v1299 = vpop.permute.xlu0 %1298
      %v1300 = vsel %vm627, %v1297, %v1299
      %v1301 = vsel %vm627, %v1299, %v1297
      %v1302 = vld [vmem:[%s630] sm:$0x3]
      %v1304 = vperm.slane %v1302, 0
      %v1305 = vperm.slane %v1302, 1
      %v1308 = vmul.f32 %v1300, %v1304
      %v1309 = vmul.f32 %v1301, %v1305
      %v1310 = vpack.c.bf16 %v1309, %v1308
      %1311 = vst [vmem:[#allocation2 + $0x138] sm:$0xff] %v1310
      %1312 = vrot.lane.b32.xlu0 %v1076, 114
      %v1313 = vpop.permute.xlu0 %1312
      %1314 = vrot.lane.b32.xlu0 %v1077, 114
      %v1315 = vpop.permute.xlu0 %1314
      %v1316 = vsel %vm645, %v1313, %v1315
      %v1317 = vsel %vm645, %v1315, %v1313
      %v1318 = vld [vmem:[%s648] sm:$0x3]
      %v1320 = vperm.slane %v1318, 0
      %v1321 = vperm.slane %v1318, 1
      %v1324 = vmul.f32 %v1316, %v1320
      %v1325 = vmul.f32 %v1317, %v1321
      %v1326 = vpack.c.bf16 %v1325, %v1324
      %1327 = vst [vmem:[#allocation2 + $0x140] sm:$0xff] %v1326
      %1328 = vrot.lane.b32.xlu0 %v1076, 113
      %v1329 = vpop.permute.xlu0 %1328
      %1330 = vrot.lane.b32.xlu0 %v1077, 113
      %v1331 = vpop.permute.xlu0 %1330
      %v1332 = vsel %vm663, %v1329, %v1331
      %v1333 = vsel %vm663, %v1331, %v1329
      %v1334 = vld [vmem:[%s666] sm:$0x3]
      %v1336 = vperm.slane %v1334, 0
      %v1337 = vperm.slane %v1334, 1
      %v1340 = vmul.f32 %v1332, %v1336
      %v1341 = vmul.f32 %v1333, %v1337
      %v1342 = vpack.c.bf16 %v1341, %v1340
      %1343 = vst [vmem:[#allocation2 + $0x148] sm:$0xff] %v1342
      %1344 = vrot.lane.b32.xlu0 %v1076, 112
      %v1345 = vpop.permute.xlu0 %1344
      %1346 = vrot.lane.b32.xlu0 %v1077, 112
      %v1347 = vpop.permute.xlu0 %1346
      %v1348 = vsel %vm681, %v1345, %v1347
      %v1349 = vsel %vm681, %v1347, %v1345
      %v1350 = vld [vmem:[%s684] sm:$0x3]
      %v1352 = vperm.slane %v1350, 0
      %v1353 = vperm.slane %v1350, 1
      %v1356 = vmul.f32 %v1348, %v1352
      %v1357 = vmul.f32 %v1349, %v1353
      %v1358 = vpack.c.bf16 %v1357, %v1356
      %1359 = vst [vmem:[#allocation2 + $0x150] sm:$0xff] %v1358
      %1360 = vrot.lane.b32.xlu0 %v1076, 111
      %v1361 = vpop.permute.xlu0 %1360
      %1362 = vrot.lane.b32.xlu0 %v1077, 111
      %v1363 = vpop.permute.xlu0 %1362
      %v1364 = vsel %vm699, %v1361, %v1363
      %v1365 = vsel %vm699, %v1363, %v1361
      %v1366 = vld [vmem:[%s702] sm:$0x3]
      %v1368 = vperm.slane %v1366, 0
      %v1369 = vperm.slane %v1366, 1
      %v1372 = vmul.f32 %v1364, %v1368
      %v1373 = vmul.f32 %v1365, %v1369
      %v1374 = vpack.c.bf16 %v1373, %v1372
      %1375 = vst [vmem:[#allocation2 + $0x158] sm:$0xff] %v1374
      %1376 = vrot.lane.b32.xlu0 %v1076, 110
      %v1377 = vpop.permute.xlu0 %1376
      %1378 = vrot.lane.b32.xlu0 %v1077, 110
      %v1379 = vpop.permute.xlu0 %1378
      %v1380 = vsel %vm717, %v1377, %v1379
      %v1381 = vsel %vm717, %v1379, %v1377
      %v1382 = vld [vmem:[%s720] sm:$0x3]
      %v1384 = vperm.slane %v1382, 0
      %v1385 = vperm.slane %v1382, 1
      %v1388 = vmul.f32 %v1380, %v1384
      %v1389 = vmul.f32 %v1381, %v1385
      %v1390 = vpack.c.bf16 %v1389, %v1388
      %1391 = vst [vmem:[#allocation2 + $0x160] sm:$0xff] %v1390
      %1392 = vrot.lane.b32.xlu0 %v1076, 98
      %v1393 = vpop.permute.xlu0 %1392
      %1394 = vrot.lane.b32.xlu0 %v1077, 98
      %v1395 = vpop.permute.xlu0 %1394
      %v1396 = vsel %vm735, %v1393, %v1395
      %v1397 = vsel %vm735, %v1395, %v1393
      %v1398 = vld [vmem:[%s738] sm:$0x3]
      %v1400 = vperm.slane %v1398, 0
      %v1401 = vperm.slane %v1398, 1
      %v1404 = vmul.f32 %v1396, %v1400
      %v1405 = vmul.f32 %v1397, %v1401
      %v1406 = vpack.c.bf16 %v1405, %v1404
      %1407 = vst [vmem:[#allocation2 + $0x168] sm:$0xff] %v1406
      %1408 = vrot.lane.b32.xlu0 %v1076, 97
      %v1409 = vpop.permute.xlu0 %1408
      %1410 = vrot.lane.b32.xlu0 %v1077, 97
      %v1411 = vpop.permute.xlu0 %1410
      %v1412 = vsel %vm753, %v1409, %v1411
      %v1413 = vsel %vm753, %v1411, %v1409
      %v1414 = vld [vmem:[%s756] sm:$0x3]
      %v1416 = vperm.slane %v1414, 0
      %v1417 = vperm.slane %v1414, 1
      %v1420 = vmul.f32 %v1412, %v1416
      %v1421 = vmul.f32 %v1413, %v1417
      %v1422 = vpack.c.bf16 %v1421, %v1420
      %1423 = vst [vmem:[#allocation2 + $0x170] sm:$0xff] %v1422
      %1424 = vrot.lane.b32.xlu0 %v1076, 96
      %v1425 = vpop.permute.xlu0 %1424
      %1426 = vrot.lane.b32.xlu0 %v1077, 96
      %v1427 = vpop.permute.xlu0 %1426
      %v1428 = vsel %vm771, %v1425, %v1427
      %v1429 = vsel %vm771, %v1427, %v1425
      %v1430 = vld [vmem:[%s774] sm:$0x3]
      %v1432 = vperm.slane %v1430, 0
      %v1433 = vperm.slane %v1430, 1
      %v1436 = vmul.f32 %v1428, %v1432
      %v1437 = vmul.f32 %v1429, %v1433
      %v1438 = vpack.c.bf16 %v1437, %v1436
      %1439 = vst [vmem:[#allocation2 + $0x178] sm:$0xff] %v1438
      %1440 = vrot.lane.b32.xlu0 %v1076, 95
      %v1441 = vpop.permute.xlu0 %1440
      %1442 = vrot.lane.b32.xlu0 %v1077, 95
      %v1443 = vpop.permute.xlu0 %1442
      %v1444 = vsel %vm789, %v1441, %v1443
      %v1445 = vsel %vm789, %v1443, %v1441
      %v1446 = vld [vmem:[%s792] sm:$0x3]
      %v1448 = vperm.slane %v1446, 0
      %v1449 = vperm.slane %v1446, 1
      %v1452 = vmul.f32 %v1444, %v1448
      %v1453 = vmul.f32 %v1445, %v1449
      %v1454 = vpack.c.bf16 %v1453, %v1452
      %1455 = vst [vmem:[#allocation2 + $0x180] sm:$0xff] %v1454
      %1456 = vrot.lane.b32.xlu0 %v1076, 94
      %v1457 = vpop.permute.xlu0 %1456
      %1458 = vrot.lane.b32.xlu0 %v1077, 94
      %v1459 = vpop.permute.xlu0 %1458
      %v1460 = vsel %vm807, %v1457, %v1459
      %v1461 = vsel %vm807, %v1459, %v1457
      %v1462 = vld [vmem:[%s810] sm:$0x3]
      %v1464 = vperm.slane %v1462, 0
      %v1465 = vperm.slane %v1462, 1
      %v1468 = vmul.f32 %v1460, %v1464
      %v1469 = vmul.f32 %v1461, %v1465
      %v1470 = vpack.c.bf16 %v1469, %v1468
      %1471 = vst [vmem:[#allocation2 + $0x188] sm:$0xff] %v1470
      %v1472 = vld [vmem:[%s4] sm:$0xff]
      %v1473 = vld [vmem:[%s4 + $0x8] sm:$0xff]
      %v1474 = vld [vmem:[#allocation2] sm:$0xff]
      %v1475 = vld [vmem:[#allocation2 + $0x8] sm:$0xff]
      %v1476 = vld [vmem:[#allocation2 + $0x10] sm:$0xff]
      %v1477 = vld [vmem:[#allocation2 + $0x18] sm:$0xff]
      %v1478 = vld [vmem:[#allocation2 + $0x20] sm:$0xff]
      %v1479 = vld [vmem:[#allocation2 + $0x28] sm:$0xff]
      %v1480 = vld [vmem:[#allocation2 + $0x30] sm:$0xff]
      %v1481 = vld [vmem:[#allocation2 + $0x38] sm:$0xff]
      %v1482 = vld [vmem:[#allocation2 + $0x40] sm:$0xff]
      %v1483 = vld [vmem:[#allocation2 + $0x48] sm:$0xff]
      %v1484 = vld [vmem:[#allocation2 + $0x50] sm:$0xff]
      %v1485 = vld [vmem:[#allocation2 + $0x58] sm:$0xff]
      %v1486 = vld [vmem:[#allocation2 + $0x60] sm:$0xff]
      %v1487 = vld [vmem:[#allocation2 + $0x68] sm:$0xff]
      %v1488 = vld [vmem:[#allocation2 + $0x70] sm:$0xff]
      %v1489 = vld [vmem:[#allocation2 + $0x78] sm:$0xff]
      %v1490 = vld [vmem:[#allocation2 + $0x80] sm:$0xff]
      %v1491 = vld [vmem:[#allocation2 + $0x88] sm:$0xff]
      %v1492 = vld [vmem:[#allocation2 + $0x90] sm:$0xff]
      %v1493 = vld [vmem:[#allocation2 + $0x98] sm:$0xff]
      %v1494 = vld [vmem:[#allocation2 + $0xa0] sm:$0xff]
      %v1495 = vld [vmem:[#allocation2 + $0xa8] sm:$0xff]
      %v1496 = vld [vmem:[#allocation2 + $0xb0] sm:$0xff]
      %v1497 = vld [vmem:[#allocation2 + $0xb8] sm:$0xff]
      %v1498 = vld [vmem:[#allocation2 + $0xc0] sm:$0xff]
      %v1499 = vld [vmem:[#allocation2 + $0xc8] sm:$0xff]
      %v1500 = vld [vmem:[#allocation2 + $0xd0] sm:$0xff]
      %v1501 = vld [vmem:[#allocation2 + $0xd8] sm:$0xff]
      %v1502 = vld [vmem:[#allocation2 + $0xe0] sm:$0xff]
      %v1503 = vld [vmem:[#allocation2 + $0xe8] sm:$0xff]
      %v1504 = vld [vmem:[#allocation2 + $0xf0] sm:$0xff]
      %v1505 = vld [vmem:[#allocation2 + $0xf8] sm:$0xff]
      %v1506 = vld [vmem:[#allocation2 + $0x100] sm:$0xff]
      %v1507 = vld [vmem:[#allocation2 + $0x108] sm:$0xff]
      %v1508 = vld [vmem:[#allocation2 + $0x110] sm:$0xff]
      %v1509 = vld [vmem:[#allocation2 + $0x118] sm:$0xff]
      %v1510 = vld [vmem:[#allocation2 + $0x120] sm:$0xff]
      %v1511 = vld [vmem:[#allocation2 + $0x128] sm:$0xff]
      %v1512 = vld [vmem:[#allocation2 + $0x130] sm:$0xff]
      %v1513 = vld [vmem:[#allocation2 + $0x138] sm:$0xff]
      %v1514 = vld [vmem:[#allocation2 + $0x140] sm:$0xff]
      %v1515 = vld [vmem:[#allocation2 + $0x148] sm:$0xff]
      %v1516 = vld [vmem:[#allocation2 + $0x150] sm:$0xff]
      %v1517 = vld [vmem:[#allocation2 + $0x158] sm:$0xff]
      %v1518 = vld [vmem:[#allocation2 + $0x160] sm:$0xff]
      %v1519 = vld [vmem:[#allocation2 + $0x168] sm:$0xff]
      %v1520 = vld [vmem:[#allocation2 + $0x170] sm:$0xff]
      %v1521 = vld [vmem:[#allocation2 + $0x178] sm:$0xff]
      %v1522 = vld [vmem:[#allocation2 + $0x180] sm:$0xff]
      %v1523 = vld [vmem:[#allocation2 + $0x188] sm:$0xff]
      %v1524 = vld [vmem:[%s7] sm:$0xff]
      %1526 = vset.pattern.permute.xlu0 0
      %1527 = vperm.xlu0 %1526, %v1524
      %v1528 = vpop.permute.xlu0 %1527
      %v1532 = vunpack.c.l.b16 %v1472
      %v1533 = vunpack.c.h.b16 %v1472
      %v1534 = vunpack.c.l.b16 %v1473
      %v1535 = vunpack.c.h.b16 %v1473
      %v1536 = vpack.c.b16 %v1532, %v1532
      %v1537 = vpack.c.b16 %v1533, %v1533
      %v1538 = vpack.c.b16 %v1534, %v1534
      %v1539 = vpack.c.b16 %v1535, %v1535
      %v1593 = vunpack.c.l.b16 %v1474
      %v1594 = vunpack.c.h.b16 %v1474
      %v1595 = vunpack.c.l.b16 %v1475
      %v1596 = vunpack.c.h.b16 %v1475
      %v1597 = vunpack.c.l.b16 %v1476
      %v1598 = vunpack.c.h.b16 %v1476
      %v1599 = vunpack.c.l.b16 %v1477
      %v1600 = vunpack.c.h.b16 %v1477
      %v1601 = vunpack.c.l.b16 %v1478
      %v1602 = vunpack.c.h.b16 %v1478
      %v1603 = vunpack.c.l.b16 %v1479
      %v1604 = vunpack.c.h.b16 %v1479
      %v1605 = vunpack.c.l.b16 %v1480
      %v1606 = vunpack.c.h.b16 %v1480
      %v1607 = vunpack.c.l.b16 %v1481
      %v1608 = vunpack.c.h.b16 %v1481
      %v1609 = vunpack.c.l.b16 %v1482
      %v1610 = vunpack.c.h.b16 %v1482
      %v1611 = vunpack.c.l.b16 %v1483
      %v1612 = vunpack.c.h.b16 %v1483
      %v1613 = vunpack.c.l.b16 %v1484
      %v1614 = vunpack.c.h.b16 %v1484
      %v1615 = vunpack.c.l.b16 %v1485
      %v1616 = vunpack.c.h.b16 %v1485
      %v1617 = vunpack.c.l.b16 %v1486
      %v1618 = vunpack.c.h.b16 %v1486
      %v1619 = vunpack.c.l.b16 %v1487
      %v1620 = vunpack.c.h.b16 %v1487
      %v1621 = vunpack.c.l.b16 %v1488
      %v1622 = vunpack.c.h.b16 %v1488
      %v1623 = vunpack.c.l.b16 %v1489
      %v1624 = vunpack.c.h.b16 %v1489
      %v1625 = vunpack.c.l.b16 %v1490
      %v1626 = vunpack.c.h.b16 %v1490
      %v1627 = vunpack.c.l.b16 %v1491
      %v1628 = vunpack.c.h.b16 %v1491
      %v1629 = vunpack.c.l.b16 %v1492
      %v1630 = vunpack.c.h.b16 %v1492
      %v1631 = vunpack.c.l.b16 %v1493
      %v1632 = vunpack.c.h.b16 %v1493
      %v1633 = vunpack.c.l.b16 %v1494
      %v1634 = vunpack.c.h.b16 %v1494
      %v1635 = vunpack.c.l.b16 %v1495
      %v1636 = vunpack.c.h.b16 %v1495
      %v1637 = vunpack.c.l.b16 %v1496
      %v1638 = vunpack.c.h.b16 %v1496
      %v1639 = vunpack.c.l.b16 %v1497
      %v1640 = vunpack.c.h.b16 %v1497
      %v1641 = vunpack.c.l.b16 %v1498
      %v1642 = vunpack.c.h.b16 %v1498
      %v1643 = vunpack.c.l.b16 %v1499
      %v1644 = vunpack.c.h.b16 %v1499
      %v1645 = vunpack.c.l.b16 %v1500
      %v1646 = vunpack.c.h.b16 %v1500
      %v1647 = vunpack.c.l.b16 %v1501
      %v1648 = vunpack.c.h.b16 %v1501
      %v1649 = vunpack.c.l.b16 %v1502
      %v1650 = vunpack.c.h.b16 %v1502
      %v1651 = vunpack.c.l.b16 %v1503
      %v1652 = vunpack.c.h.b16 %v1503
      %v1653 = vunpack.c.l.b16 %v1504
      %v1654 = vunpack.c.h.b16 %v1504
      %v1655 = vunpack.c.l.b16 %v1505
      %v1656 = vunpack.c.h.b16 %v1505
      %v1657 = vunpack.c.l.b16 %v1506
      %v1658 = vunpack.c.h.b16 %v1506
      %v1659 = vunpack.c.l.b16 %v1507
      %v1660 = vunpack.c.h.b16 %v1507
      %v1661 = vunpack.c.l.b16 %v1508
      %v1662 = vunpack.c.h.b16 %v1508
      %v1663 = vunpack.c.l.b16 %v1509
      %v1664 = vunpack.c.h.b16 %v1509
      %v1665 = vunpack.c.l.b16 %v1510
      %v1666 = vunpack.c.h.b16 %v1510
      %v1667 = vunpack.c.l.b16 %v1511
      %v1668 = vunpack.c.h.b16 %v1511
      %v1669 = vunpack.c.l.b16 %v1512
      %v1670 = vunpack.c.h.b16 %v1512
      %v1671 = vunpack.c.l.b16 %v1513
      %v1672 = vunpack.c.h.b16 %v1513
      %v1673 = vunpack.c.l.b16 %v1514
      %v1674 = vunpack.c.h.b16 %v1514
      %v1675 = vunpack.c.l.b16 %v1515
      %v1676 = vunpack.c.h.b16 %v1515
      %v1677 = vunpack.c.l.b16 %v1516
      %v1678 = vunpack.c.h.b16 %v1516
      %v1679 = vunpack.c.l.b16 %v1517
      %v1680 = vunpack.c.h.b16 %v1517
      %v1681 = vunpack.c.l.b16 %v1518
      %v1682 = vunpack.c.h.b16 %v1518
      %v1683 = vunpack.c.l.b16 %v1519
      %v1684 = vunpack.c.h.b16 %v1519
      %v1685 = vunpack.c.l.b16 %v1520
      %v1686 = vunpack.c.h.b16 %v1520
      %v1687 = vunpack.c.l.b16 %v1521
      %v1688 = vunpack.c.h.b16 %v1521
      %v1689 = vunpack.c.l.b16 %v1522
      %v1690 = vunpack.c.h.b16 %v1522
      %v1691 = vunpack.c.l.b16 %v1523
      %v1692 = vunpack.c.h.b16 %v1523
      %v1693 = vpack.c.b16 %v1595, %v1593
      %v1694 = vpack.c.b16 %v1596, %v1594
      %v1695 = vpack.c.b16 %v1599, %v1597
      %v1696 = vpack.c.b16 %v1600, %v1598
      %v1697 = vpack.c.b16 %v1603, %v1601
      %v1698 = vpack.c.b16 %v1604, %v1602
      %v1699 = vpack.c.b16 %v1607, %v1605
      %v1700 = vpack.c.b16 %v1608, %v1606
      %v1701 = vpack.c.b16 %v1611, %v1609
      %v1702 = vpack.c.b16 %v1612, %v1610
      %v1703 = vpack.c.b16 %v1615, %v1613
      %v1704 = vpack.c.b16 %v1616, %v1614
      %v1705 = vpack.c.b16 %v1619, %v1617
      %v1706 = vpack.c.b16 %v1620, %v1618
      %v1707 = vpack.c.b16 %v1623, %v1621
      %v1708 = vpack.c.b16 %v1624, %v1622
      %v1709 = vpack.c.b16 %v1627, %v1625
      %v1710 = vpack.c.b16 %v1628, %v1626
      %v1711 = vpack.c.b16 %v1631, %v1629
      %v1712 = vpack.c.b16 %v1632, %v1630
      %v1713 = vpack.c.b16 %v1635, %v1633
      %v1714 = vpack.c.b16 %v1636, %v1634
      %v1715 = vpack.c.b16 %v1639, %v1637
      %v1716 = vpack.c.b16 %v1640, %v1638
      %v1717 = vpack.c.b16 %v1643, %v1641
      %v1718 = vpack.c.b16 %v1644, %v1642
      %v1719 = vpack.c.b16 %v1647, %v1645
      %v1720 = vpack.c.b16 %v1648, %v1646
      %v1721 = vpack.c.b16 %v1651, %v1649
      %v1722 = vpack.c.b16 %v1652, %v1650
      %v1723 = vpack.c.b16 %v1655, %v1653
      %v1724 = vpack.c.b16 %v1656, %v1654
      %v1725 = vpack.c.b16 %v1659, %v1657
      %v1726 = vpack.c.b16 %v1660, %v1658
      %v1727 = vpack.c.b16 %v1663, %v1661
      %v1728 = vpack.c.b16 %v1664, %v1662
      %v1729 = vpack.c.b16 %v1667, %v1665
      %v1730 = vpack.c.b16 %v1668, %v1666
      %v1731 = vpack.c.b16 %v1671, %v1669
      %v1732 = vpack.c.b16 %v1672, %v1670
      %v1733 = vpack.c.b16 %v1675, %v1673
      %v1734 = vpack.c.b16 %v1676, %v1674
      %v1735 = vpack.c.b16 %v1679, %v1677
      %v1736 = vpack.c.b16 %v1680, %v1678
      %v1737 = vpack.c.b16 %v1683, %v1681
      %v1738 = vpack.c.b16 %v1684, %v1682
      %v1739 = vpack.c.b16 %v1687, %v1685
      %v1740 = vpack.c.b16 %v1688, %v1686
      %v1741 = vpack.c.b16 %v1691, %v1689
      %v1742 = vpack.c.b16 %v1692, %v1690
      %vm1793 = vcmask 130048
      %v1795 = vsel %vm1793, %v1539, 0
      %1797 = vmatpush.bf16.msra.mxu0 %v1707
      %1798 = vmatpush.bf16.msra.mxu0 %v1705
      %1799 = vmatpush.bf16.msra.mxu0 %v1703
      %1800 = vmatpush.bf16.msra.mxu0 %v1701
      %1801 = vmatpush.bf16.msra.mxu0 %v1699
      %1802 = vmatpush.bf16.msra.mxu0 %v1697
      %1803 = vmatpush.bf16.msra.mxu0 %v1695
      %1804 = vmatpush.bf16.msra.mxu0 %v1693
      %1805 = vmatmul.bf16.gmra.mxu0 %v1536
      %v1806 = vpop.f32.mrf.mxu0
      %v1807 = vadd.f32 %v1528, %v1806
      %v1808 = vpop.f32.mrf.mxu0
      %1809 = vdwg.mxu0
      %1810 = vmatpush.bf16.msra.mxu0 %v1723
      %1811 = vmatpush.bf16.msra.mxu0 %v1721
      %1812 = vmatpush.bf16.msra.mxu0 %v1719
      %1813 = vmatpush.bf16.msra.mxu0 %v1717
      %1814 = vmatpush.bf16.msra.mxu0 %v1715
      %1815 = vmatpush.bf16.msra.mxu0 %v1713
      %1816 = vmatpush.bf16.msra.mxu0 %v1711
      %1817 = vmatpush.bf16.msra.mxu0 %v1709
      %1818 = vmatmul.bf16.gmra.mxu0 %v1537
      %v1819 = vpop.f32.mrf.mxu0
      %v1820 = vadd.f32 %v1807, %v1819
      %v1821 = vpop.f32.mrf.mxu0
      %1822 = vdwg.mxu0
      %1823 = vmatpush.bf16.msra.mxu0 %v1739
      %1824 = vmatpush.bf16.msra.mxu0 %v1737
      %1825 = vmatpush.bf16.msra.mxu0 %v1735
      %1826 = vmatpush.bf16.msra.mxu0 %v1733
      %1827 = vmatpush.bf16.msra.mxu0 %v1731
      %1828 = vmatpush.bf16.msra.mxu0 %v1729
      %1829 = vmatpush.bf16.msra.mxu0 %v1727
      %1830 = vmatpush.bf16.msra.mxu0 %v1725
      %1831 = vmatmul.bf16.gmra.mxu0 %v1538
      %v1832 = vpop.f32.mrf.mxu0
      %v1833 = vadd.f32 %v1820, %v1832
      %v1834 = vpop.f32.mrf.mxu0
      %1835 = vdwg.mxu0
      %1836 = vmatpush.bf16.msra.mxu0 0
      %1837 = vmatpush.bf16.msra.mxu0 0
      %1838 = vmatpush.bf16.msra.mxu0 0
      %1839 = vmatpush.bf16.msra.mxu0 0
      %1840 = vmatpush.bf16.msra.mxu0 0
      %1841 = vmatpush.bf16.msra.mxu0 0
      %1842 = vmatpush.bf16.msra.mxu0 0
      %1843 = vmatpush.bf16.msra.mxu0 %v1741
      %1844 = vmatmul.bf16.gmra.mxu0 %v1795
      %v1845 = vpop.f32.mrf.mxu0
      %v1846 = vadd.f32 %v1833, %v1845
      %v1847 = vpop.f32.mrf.mxu0
      %1848 = vdwg.mxu0
      %1849 = vmatpush.bf16.msra.mxu0 %v1708
      %1850 = vmatpush.bf16.msra.mxu0 %v1706
      %1851 = vmatpush.bf16.msra.mxu0 %v1704
      %1852 = vmatpush.bf16.msra.mxu0 %v1702
      %1853 = vmatpush.bf16.msra.mxu0 %v1700
      %1854 = vmatpush.bf16.msra.mxu0 %v1698
      %1855 = vmatpush.bf16.msra.mxu0 %v1696
      %1856 = vmatpush.bf16.msra.mxu0 %v1694
      %1857 = vmatmul.bf16.gmra.mxu0 %v1536
      %v1858 = vpop.f32.mrf.mxu0
      %v1859 = vadd.f32 %v1528, %v1858
      %v1860 = vpop.f32.mrf.mxu0
      %1861 = vdwg.mxu0
      %1862 = vmatpush.bf16.msra.mxu0 %v1724
      %1863 = vmatpush.bf16.msra.mxu0 %v1722
      %1864 = vmatpush.bf16.msra.mxu0 %v1720
      %1865 = vmatpush.bf16.msra.mxu0 %v1718
      %1866 = vmatpush.bf16.msra.mxu0 %v1716
      %1867 = vmatpush.bf16.msra.mxu0 %v1714
      %1868 = vmatpush.bf16.msra.mxu0 %v1712
      %1869 = vmatpush.bf16.msra.mxu0 %v1710
      %1870 = vmatmul.bf16.gmra.mxu0 %v1537
      %v1871 = vpop.f32.mrf.mxu0
      %v1872 = vadd.f32 %v1859, %v1871
      %v1873 = vpop.f32.mrf.mxu0
      %1874 = vdwg.mxu0
      %1875 = vmatpush.bf16.msra.mxu0 %v1740
      %1876 = vmatpush.bf16.msra.mxu0 %v1738
      %1877 = vmatpush.bf16.msra.mxu0 %v1736
      %1878 = vmatpush.bf16.msra.mxu0 %v1734
      %1879 = vmatpush.bf16.msra.mxu0 %v1732
      %1880 = vmatpush.bf16.msra.mxu0 %v1730
      %1881 = vmatpush.bf16.msra.mxu0 %v1728
      %1882 = vmatpush.bf16.msra.mxu0 %v1726
      %1883 = vmatmul.bf16.gmra.mxu0 %v1538
      %v1884 = vpop.f32.mrf.mxu0
      %v1885 = vadd.f32 %v1872, %v1884
      %v1886 = vpop.f32.mrf.mxu0
      %1887 = vdwg.mxu0
      %1888 = vmatpush.bf16.msra.mxu0 0
      %1889 = vmatpush.bf16.msra.mxu0 0
      %1890 = vmatpush.bf16.msra.mxu0 0
      %1891 = vmatpush.bf16.msra.mxu0 0
      %1892 = vmatpush.bf16.msra.mxu0 0
      %1893 = vmatpush.bf16.msra.mxu0 0
      %1894 = vmatpush.bf16.msra.mxu0 0
      %1895 = vmatpush.bf16.msra.mxu0 %v1742
      %1896 = vmatmul.bf16.gmra.mxu0 %v1795
      %v1897 = vpop.f32.mrf.mxu0
      %v1898 = vadd.f32 %v1885, %v1897
      %v1899 = vpop.f32.mrf.mxu0
      %1900 = vdwg.mxu0
      %v1901 = vadd.f32 %v1846, %v1898
      %1902 = vadd.xlane.f32.xlu0 %v1901
      %v1903 = vpop.xlane.xlu0 %1902
      %v1904 = vmul.f32 %v1903, %v347
      %v1905 = vsub.f32 %v1846, %v1904
      %v1906 = vsub.f32 %v1898, %v1904
      %v1907 = vmul.f32 %v1905, %v1905
      %v1908 = vmul.f32 %v1906, %v1906
      %v1909 = vadd.f32 %v1907, %v1908
      %1910 = vadd.xlane.f32.xlu0 %v1909
      %v1911 = vpop.xlane.xlu0 %1910
      %v1912 = vmul.f32 %v1911, %v347
      %v1913 = vadd.f32 %v1912, 1e-05
      %v1914 = vrsqrt.pop %v1913
      %v1915 = vmul.f32 %v1914, %v1913
      %v1916 = vmul.f32 %v1915, %v1914
      %v1917 = vmul.f32 0.5, %v1916
      %v1918 = vsub.f32 1.5, %v1917
      %v1919 = vmul.f32 %v1914, %v1918
      %vm1920 = vweird.f32 %v1913
      %vm1921 = vweird.f32 %v1914
      %vm1922 = vmor %vm1920, %vm1921
      %v1923 = vsel %vm1922, %v1914, %v1919
      %v1924 = vmul.f32 %v1905, %v1923
      %v1925 = vmul.f32 %v1906, %v1923
      %vm1926 = vcmp.ge.f32.partialorder %v1924, 0.0
      %vm1927 = vcmp.ge.f32.partialorder %v1925, 0.0
      %v1928 = vmul.f32 %v372, %v1924
      %v1929 = vmul.f32 %v372, %v1925
      %v1930 = vsel %vm1926, %v1924, %v1928
      %v1931 = vsel %vm1927, %v1925, %v1929
      %v1932 = vld [vmem:[%s5] sm:$0xf]
      %v1933 = vpack.c.bf16 %v1076, %v375
      %v1934 = vpack.c.bf16 %v1077, %v376
      %v1935 = vpack.c.bf16 %v1930, %v1930
      %v1936 = vpack.c.bf16 %v1931, %v1931
      %v1937 = vld [vmem:[%s8] sm:$0xff]
      %1939 = vset.pattern.permute.xlu0 0
      %1940 = vperm.xlu0 %1939, %v1937
      %v1941 = vpop.permute.xlu0 %1940
      %vm1943 = vcmask 195584
      %v1945 = vsel %vm1943, %v1932, 0
      %v1948 = vsel %vm988, %v1935, 0
      %v1951 = vsel %vm988, %v1936, 0
      %1953 = vmatpush.bf16.msra.mxu0 0
      %1954 = vmatpush.bf16.msra.mxu0 0
      %1955 = vmatpush.bf16.msra.mxu0 0
      %1956 = vmatpush.bf16.msra.mxu0 0
      %1957 = vmatpush.bf16.msra.mxu0 0
      %1958 = vmatpush.bf16.msra.mxu0 0
      %1959 = vmatpush.bf16.msra.mxu0 %v1948
      %1960 = vmatpush.bf16.msra.mxu0 %v1933
      %1961 = vmatmul.bf16.gmra.mxu0 %v1945
      %v1962 = vpop.f32.mrf.mxu0
      %v1963 = vadd.f32 %v1941, %v1962
      %v1964 = vpop.f32.mrf.mxu0
      %1965 = vdwg.mxu0
      %1966 = vmatpush.bf16.msra.mxu0 0
      %1967 = vmatpush.bf16.msra.mxu0 0
      %1968 = vmatpush.bf16.msra.mxu0 0
      %1969 = vmatpush.bf16.msra.mxu0 0
      %1970 = vmatpush.bf16.msra.mxu0 0
      %1971 = vmatpush.bf16.msra.mxu0 0
      %1972 = vmatpush.bf16.msra.mxu0 %v1951
      %1973 = vmatpush.bf16.msra.mxu0 %v1934
      %1974 = vmatmul.bf16.gmra.mxu0 %v1945
      %v1975 = vpop.f32.mrf.mxu0
      %v1976 = vadd.f32 %v1941, %v1975
      %v1977 = vpop.f32.mrf.mxu0
      %1978 = vdwg.mxu0
      %1979 = vst [vmem:[%s333] sm:$0xff] %v1963
      %1980 = vst [vmem:[%s333 + $0x8] sm:$0xff] %v1976
      %p1981 = scmp.lt.s32.totalorder %s21, 1
      %s1982 = scalar_select %p1981, %s21, 1
      %s1983 = smul.addr %s1982, 2
      %s1984 = smul.addr %s1983, 8
      %s1985 = scalar_lea.vmem %s9, %s1984
      // Predicated region
      $region57: #{dense_block_forward.1} parent=55 // pred_check
        %p1986 = pneg %p233
      $region58: #{dense_block_forward.1} parent=55 // pred_check_branch
        %1988 = sbr.rel (%p1986) target = $region60
      $region59: #{dense_block_forward.1} parent=55 // pred_region
        _
      $region60: #{dense_block_forward.1} parent=55 // pred_fallthru
        _
    $region56: #{dense_block_forward.1} parent=5 // pred_fallthru
      _
    %p1989 = scmp.le.s32.totalorder 2, %s16
    // Predicated region
    $region61: #{dense_block_forward.1} parent=5 // pred_check
      %p1990 = pneg %p1989
    $region62: #{dense_block_forward.1} parent=5 // pred_check_branch
      %1992 = sbr.rel (%p1990) target = $region64
    $region63: #{dense_block_forward.1} parent=5 // pred_region
      %s1993 = ssub.s32 %s16, 2
      // Predicated region
      $region65: #{dense_block_forward.1} parent=63 // pred_check
        %p1994 = pneg %p239
      $region66: #{dense_block_forward.1} parent=63 // pred_check_branch
        %1996 = sbr.rel (%p1994) target = $region68
      $region67: #{dense_block_forward.1} parent=63 // pred_region
        %p1997 = scmp.lt.s32.totalorder %s22, 1
        %s1998 = scalar_select %p1997, %s22, 1
        %s1999 = smul.addr %s1998, 2
        %s2000 = smul.addr %s1999, 8
        %s2001 = scalar_lea.vmem %s9, %s2000
      $region68: #{dense_block_forward.1} parent=63 // pred_fallthru
        _
    $region64: #{dense_block_forward.1} parent=5 // pred_fallthru
      _
  $region6: #{dense_block_forward.1} parent=0 // loop_footer
    %s20 = sadd.s32 1, %s16
  $region7: #{dense_block_forward.1} parent=0 // loop_footer_branch
    %15 = sbr.rel target = $region3
  $region8: #{dense_block_forward.1} parent=0 // loop_exit
    _

</llo_original>
